<compile_context>
chip_gen: v7x
topology: tpu7x:2x2x1
jax: 0.10.0
libtpu: 0.0.40
codegen_flags: <defaults>
</compile_context>

<pallas_src>
import functools
import math

import jax
import jax.numpy as jnp
from jax import lax
from jax.experimental import pallas as pl
from jax.experimental.pallas import tpu as pltpu

EMBEDDING_SIZE = 128   # ACModel: memory_dim
DEC_DIM = 128          # dec_dim
LEN_MSG = 8
NUM_SYMBOLS = 8
LANE_PAD = 128         # lane-dense head width (>= NUM_SYMBOLS)
SUBLANES = 8           # f32 sublane count; batch padded to a multiple of this


def _vmem_spec():
    # Whole array resident in VMEM, no pipelining / double buffering.
    return pl.BlockSpec(memory_space=pltpu.MemorySpace.VMEM)


# ---------------------------------------------------------------------------
# Fused decoder kernel: LSTM over T steps + linear head + log_softmax
# ---------------------------------------------------------------------------
def _decoder_kernel(x_ref, wih_ref, whh_ref, b_ref, wout_ref, bout_ref,
                    out_ref, hseq_ref, *, len_msg, num_symbols, hidden):
    B = x_ref.shape[0]          # padded batch (multiple of 8)
    H = hidden
    H3 = 3 * H

    # Input is constant across timesteps -> input-side gate pre-activation once.
    gx = jnp.dot(x_ref[...].astype(wih_ref.dtype), wih_ref[...],
                 preferred_element_type=jnp.float32) + b_ref[...]
    w_hh = whh_ref[...]         # bf16, resident in VMEM for the whole time loop

    h = jnp.zeros((B, H), jnp.float32)        # nn.LSTM default zero initial state
    c = jnp.zeros((B, H), jnp.float32)
    for t in range(len_msg):                  # static unroll (len_msg = 8)
        gates = gx + jnp.dot(h.astype(w_hh.dtype), w_hh,
                             preferred_element_type=jnp.float32)
        # Gate columns are pre-permuted to [i | f | o | g]:
        ifo = jax.nn.sigmoid(gates[:, 0:H3])          # one sigmoid over 3 gates
        g_g = jnp.tanh(gates[:, H3:4 * H])            # one tanh
        i_g = ifo[:, 0:H]
        f_g = ifo[:, H:2 * H]
        o_g = ifo[:, 2 * H:H3]
        c = f_g * c + i_g * g_g
        h = o_g * jnp.tanh(c)
        hseq_ref[pl.ds(t * B, B), :] = h              # aligned (t*B % 8 == 0) store

    # One batched head matmul over all timesteps (rows are t-major), log_softmax fused.
    h_all = hseq_ref[...].astype(wout_ref.dtype)                      # (T*B, H)
    logits = (jnp.dot(h_all, wout_ref[...], preferred_element_type=jnp.float32)
              + bout_ref[...])                                        # (T*B, 128)
    lane = lax.broadcasted_iota(jnp.int32, logits.shape, 1)
    masked = jnp.where(lane < num_symbols, logits, jnp.float32(-1e30))
    m = jnp.max(masked, axis=1, keepdims=True)
    e = jnp.exp(masked - m)                  # padded lanes underflow to exactly 0
    out_ref[...] = masked - m - jnp.log(jnp.sum(e, axis=1, keepdims=True))


def decoder_forward(params, inputs, *, len_msg=LEN_MSG, num_symbols=NUM_SYMBOLS):
    """log_softmax(Linear(LSTM(inputs repeated len_msg times))) -> (B, len_msg, num_symbols)."""
    B, E = inputs.shape
    H = params["w_hh"].shape[0]

    # Pad batch to a full 8-sublane tile so all kernel tiles are dense.
    Bp = max(SUBLANES, ((B + SUBLANES - 1) // SUBLANES) * SUBLANES)
    x = inputs if Bp == B else jnp.pad(inputs, ((0, Bp - B), (0, 0)))

    out = pl.pallas_call(
        functools.partial(_decoder_kernel, len_msg=len_msg,
                          num_symbols=num_symbols, hidden=H),
        out_shape=jax.ShapeDtypeStruct((len_msg * Bp, LANE_PAD), jnp.float32),
        in_specs=[_vmem_spec() for _ in range(6)],
        out_specs=_vmem_spec(),
        scratch_shapes=[pltpu.VMEM((len_msg * Bp, H), jnp.float32)],
    )(x, params["w_ih"], params["w_hh"], params["b"],
      params["w_out"], params["b_out"])

    # (T*Bp, 128) t-major -> (B, T, num_symbols); cheap XLA glue on a tiny array.
    # NOTE: padded lanes / padded batch rows hold garbage logits and are sliced off here.
    out = jnp.swapaxes(out.reshape(len_msg, Bp, LANE_PAD), 0, 1)
    return out[:B, :, :num_symbols]


# ---------------------------------------------------------------------------
# Pure-JAX reference (PyTorch semantics, f32 HIGHEST precision) and param init
# ---------------------------------------------------------------------------
def decoder_reference(params, inputs, *, len_msg=LEN_MSG):
    B, _ = inputs.shape
    H = params["w_hh"].shape[0]
    hp = lax.Precision.HIGHEST
    gx = (jnp.dot(inputs, params["w_ih"], precision=hp)
          + params["b_ih"] + params["b_hh"])
    h = jnp.zeros((B, H), jnp.float32)
    c = jnp.zeros((B, H), jnp.float32)
    hs = []
    for _ in range(len_msg):
        gates = gx + jnp.dot(h, params["w_hh"], precision=hp)
        i_g = jax.nn.sigmoid(gates[:, 0:H])           # PyTorch gate order: i, f, g, o
        f_g = jax.nn.sigmoid(gates[:, H:2 * H])
        g_g = jnp.tanh(gates[:, 2 * H:3 * H])
        o_g = jax.nn.sigmoid(gates[:, 3 * H:4 * H])
        c = f_g * c + i_g * g_g
        h = o_g * jnp.tanh(c)
        hs.append(h)
    h_all = jnp.stack(hs, axis=1)                                     # (B, T, H)
    logits = jnp.dot(h_all, params["w_out"], precision=hp) + params["b_out"]
    return jax.nn.log_softmax(logits, axis=2)


def init_params(key, embedding_size=EMBEDDING_SIZE, dec_dim=DEC_DIM,
                num_symbols=NUM_SYMBOLS):
    """PyTorch-default init: U(-1/sqrt(H), 1/sqrt(H)); stored pre-transposed, in the
    standard PyTorch gate order [i | f | g | o]."""
    H, E, S = dec_dim, embedding_size, num_symbols
    k = 1.0 / math.sqrt(H)
    ks = jax.random.split(key, 6)
    u = lambda kk, shape: jax.random.uniform(kk, shape, jnp.float32, -k, k)
    return {
        "w_ih": u(ks[0], (E, 4 * H)),   # weight_ih_l0.T
        "w_hh": u(ks[1], (H, 4 * H)),   # weight_hh_l0.T
        "b_ih": u(ks[2], (4 * H,)),
        "b_hh": u(ks[3], (4 * H,)),
        "w_out": u(ks[4], (H, S)),      # linear.weight.T
        "b_out": u(ks[5], (S,)),
    }


def to_kernel_params(p):
    """Kernel layout: gate columns permuted [i,f,g,o] -> [i,f,o,g], weights bf16,
    combined bias, head lane-padded to LANE_PAD columns."""
    H = p["w_hh"].shape[0]
    S = p["w_out"].shape[1]

    def reorder(w):                         # permute last axis [i|f|g|o] -> [i|f|o|g]
        i, f, g, o = jnp.split(w, 4, axis=-1)
        return jnp.concatenate([i, f, o, g], axis=-1)

    w_ih = reorder(p["w_ih"]).astype(jnp.bfloat16)
    w_hh = reorder(p["w_hh"]).astype(jnp.bfloat16)
    b = reorder((p["b_ih"] + p["b_hh"]).reshape(1, 4 * H))            # f32 (1, 4H)
    w_out = (jnp.zeros((H, LANE_PAD), jnp.bfloat16)
             .at[:, :S].set(p["w_out"].astype(jnp.bfloat16)))
    b_out = jnp.zeros((1, LANE_PAD), jnp.float32).at[:, :S].set(p["b_out"])
    return {"w_ih": w_ih, "w_hh": w_hh, "b": b, "w_out": w_out, "b_out": b_out}


if __name__ == "__main__":
    key = jax.random.PRNGKey(0)
    kp, kx = jax.random.split(key)

    B = 2
    ref_params = init_params(kp)
    krn_params = to_kernel_params(ref_params)
    inputs = 0.1 * jax.random.normal(kx, (B, EMBEDDING_SIZE), dtype=jnp.float32)

    fwd = jax.jit(decoder_forward)
    out = jax.block_until_ready(fwd(krn_params, inputs))

    # Shape / sanity checks.
    assert out.shape == (B, LEN_MSG, NUM_SYMBOLS)
    assert bool(jnp.all(jnp.isfinite(out)))
    # OneHotCategorical logits are log-probs: each row must normalize.
    assert bool(jnp.allclose(jnp.exp(out).sum(-1), 1.0, atol=1e-3))
    # Cross-check against the f32 HIGHEST-precision reference (kernel uses bf16 MXU).
    ref = decoder_reference(ref_params, inputs)
    assert bool(jnp.allclose(out, ref, atol=5e-2, rtol=5e-2))

    print("KERNEL_OK")
</pallas_src>

<mosaic_0001>
module attributes {stable_mosaic.version = 11 : i64} {
  func.func @_decoder_kernel(%arg0: memref<8x128xf32, #tpu.memory_space<vmem>>, %arg1: memref<128x512xbf16, #tpu.memory_space<vmem>>, %arg2: memref<128x512xbf16, #tpu.memory_space<vmem>>, %arg3: memref<1x512xf32, #tpu.memory_space<vmem>>, %arg4: memref<128x128xbf16, #tpu.memory_space<vmem>>, %arg5: memref<1x128xf32, #tpu.memory_space<vmem>>, %arg6: memref<64x128xf32, #tpu.memory_space<vmem>>, %arg7: memref<64x128xf32, #tpu.memory_space<vmem>>) attributes {dimension_semantics = [], scalar_prefetch = 0 : i64, scratch_operands = 1 : i64, tpu.core_type = #tpu.core_type<tc>} {
    %c0 = arith.constant 0 : index
    %c0_0 = arith.constant 0 : index
    %0 = vector.load %arg0[%c0, %c0_0] : memref<8x128xf32, #tpu.memory_space<vmem>>, vector<8x128xf32>
    %1 = arith.truncf %0 : vector<8x128xf32> to vector<8x128xbf16>
    %c0_1 = arith.constant 0 : index
    %c0_2 = arith.constant 0 : index
    %2 = vector.load %arg1[%c0_1, %c0_2] : memref<128x512xbf16, #tpu.memory_space<vmem>>, vector<128x512xbf16>
    %cst = arith.constant dense<0.000000e+00> : vector<8x512xf32>
    %3 = tpu.matmul %1, %2, %cst {dimension_numbers = #tpu.dot_dimension_numbers<[1], [0], [0], [1], [0, 0, 1, 1], [], []>} : vector<8x128xbf16>, vector<128x512xbf16>, vector<8x512xf32> -> vector<8x512xf32>
    %c0_3 = arith.constant 0 : index
    %c0_4 = arith.constant 0 : index
    %4 = vector.load %arg3[%c0_3, %c0_4] : memref<1x512xf32, #tpu.memory_space<vmem>>, vector<1x512xf32>
    %5 = vector.broadcast %4 : vector<1x512xf32> to vector<8x512xf32>
    %6 = arith.addf %3, %5 : vector<8x512xf32>
    %c0_5 = arith.constant 0 : index
    %c0_6 = arith.constant 0 : index
    %7 = vector.load %arg2[%c0_5, %c0_6] : memref<128x512xbf16, #tpu.memory_space<vmem>>, vector<128x512xbf16>
    %cst_7 = arith.constant 0.000000e+00 : f32
    %8 = vector.broadcast %cst_7 : f32 to vector<8x128xf32>
    %cst_8 = arith.constant 0.000000e+00 : f32
    %9 = vector.broadcast %cst_8 : f32 to vector<8x128xf32>
    %10 = arith.truncf %8 : vector<8x128xf32> to vector<8x128xbf16>
    %cst_9 = arith.constant dense<0.000000e+00> : vector<8x512xf32>
    %11 = tpu.matmul %10, %7, %cst_9 {dimension_numbers = #tpu.dot_dimension_numbers<[1], [0], [0], [1], [0, 0, 1, 1], [], []>} : vector<8x128xbf16>, vector<128x512xbf16>, vector<8x512xf32> -> vector<8x512xf32>
    %12 = arith.addf %6, %11 : vector<8x512xf32>
    %13 = vector.extract_strided_slice %12 {offsets = [0, 0], sizes = [8, 384], strides = [1, 1]} : vector<8x512xf32> to vector<8x384xf32>
    %14 = arith.negf %13 : vector<8x384xf32>
    %15 = math.exp %14 : vector<8x384xf32>
    %cst_10 = arith.constant 1.000000e+00 : f32
    %16 = vector.broadcast %cst_10 : f32 to vector<8x384xf32>
    %17 = arith.addf %16, %15 : vector<8x384xf32>
    %18 = arith.divf %16, %17 : vector<8x384xf32>
    %19 = vector.extract_strided_slice %12 {offsets = [0, 384], sizes = [8, 128], strides = [1, 1]} : vector<8x512xf32> to vector<8x128xf32>
    %20 = math.tanh %19 : vector<8x128xf32>
    %21 = vector.extract_strided_slice %18 {offsets = [0, 0], sizes = [8, 128], strides = [1, 1]} : vector<8x384xf32> to vector<8x128xf32>
    %22 = vector.extract_strided_slice %18 {offsets = [0, 128], sizes = [8, 128], strides = [1, 1]} : vector<8x384xf32> to vector<8x128xf32>
    %23 = vector.extract_strided_slice %18 {offsets = [0, 256], sizes = [8, 128], strides = [1, 1]} : vector<8x384xf32> to vector<8x128xf32>
    %24 = arith.mulf %22, %9 : vector<8x128xf32>
    %25 = arith.mulf %21, %20 : vector<8x128xf32>
    %26 = arith.addf %24, %25 : vector<8x128xf32>
    %27 = math.tanh %26 : vector<8x128xf32>
    %28 = arith.mulf %23, %27 : vector<8x128xf32>
    %c0_11 = arith.constant 0 : index
    %c0_12 = arith.constant 0 : index
    %29 = vector.load %arg7[%c0_11, %c0_12] : memref<64x128xf32, #tpu.memory_space<vmem>>, vector<8x128xf32>
    tpu.vector_store %arg7[%c0_11, %c0_12], %28 {strides = array<i32>} : memref<64x128xf32, #tpu.memory_space<vmem>>, vector<8x128xf32>,
    %30 = arith.truncf %28 : vector<8x128xf32> to vector<8x128xbf16>
    %cst_13 = arith.constant dense<0.000000e+00> : vector<8x512xf32>
    %31 = tpu.matmul %30, %7, %cst_13 {dimension_numbers = #tpu.dot_dimension_numbers<[1], [0], [0], [1], [0, 0, 1, 1], [], []>} : vector<8x128xbf16>, vector<128x512xbf16>, vector<8x512xf32> -> vector<8x512xf32>
    %32 = arith.addf %6, %31 : vector<8x512xf32>
    %33 = vector.extract_strided_slice %32 {offsets = [0, 0], sizes = [8, 384], strides = [1, 1]} : vector<8x512xf32> to vector<8x384xf32>
    %34 = arith.negf %33 : vector<8x384xf32>
    %35 = math.exp %34 : vector<8x384xf32>
    %cst_14 = arith.constant 1.000000e+00 : f32
    %36 = vector.broadcast %cst_14 : f32 to vector<8x384xf32>
    %37 = arith.addf %36, %35 : vector<8x384xf32>
    %38 = arith.divf %36, %37 : vector<8x384xf32>
    %39 = vector.extract_strided_slice %32 {offsets = [0, 384], sizes = [8, 128], strides = [1, 1]} : vector<8x512xf32> to vector<8x128xf32>
    %40 = math.tanh %39 : vector<8x128xf32>
    %41 = vector.extract_strided_slice %38 {offsets = [0, 0], sizes = [8, 128], strides = [1, 1]} : vector<8x384xf32> to vector<8x128xf32>
    %42 = vector.extract_strided_slice %38 {offsets = [0, 128], sizes = [8, 128], strides = [1, 1]} : vector<8x384xf32> to vector<8x128xf32>
    %43 = vector.extract_strided_slice %38 {offsets = [0, 256], sizes = [8, 128], strides = [1, 1]} : vector<8x384xf32> to vector<8x128xf32>
    %44 = arith.mulf %42, %26 : vector<8x128xf32>
    %45 = arith.mulf %41, %40 : vector<8x128xf32>
    %46 = arith.addf %44, %45 : vector<8x128xf32>
    %47 = math.tanh %46 : vector<8x128xf32>
    %48 = arith.mulf %43, %47 : vector<8x128xf32>
    %c8 = arith.constant 8 : index
    %c0_15 = arith.constant 0 : index
    %49 = vector.load %arg7[%c8, %c0_15] : memref<64x128xf32, #tpu.memory_space<vmem>>, vector<8x128xf32>
    tpu.vector_store %arg7[%c8, %c0_15], %48 {strides = array<i32>} : memref<64x128xf32, #tpu.memory_space<vmem>>, vector<8x128xf32>,
    %50 = arith.truncf %48 : vector<8x128xf32> to vector<8x128xbf16>
    %cst_16 = arith.constant dense<0.000000e+00> : vector<8x512xf32>
    %51 = tpu.matmul %50, %7, %cst_16 {dimension_numbers = #tpu.dot_dimension_numbers<[1], [0], [0], [1], [0, 0, 1, 1], [], []>} : vector<8x128xbf16>, vector<128x512xbf16>, vector<8x512xf32> -> vector<8x512xf32>
    %52 = arith.addf %6, %51 : vector<8x512xf32>
    %53 = vector.extract_strided_slice %52 {offsets = [0, 0], sizes = [8, 384], strides = [1, 1]} : vector<8x512xf32> to vector<8x384xf32>
    %54 = arith.negf %53 : vector<8x384xf32>
    %55 = math.exp %54 : vector<8x384xf32>
    %cst_17 = arith.constant 1.000000e+00 : f32
    %56 = vector.broadcast %cst_17 : f32 to vector<8x384xf32>
    %57 = arith.addf %56, %55 : vector<8x384xf32>
    %58 = arith.divf %56, %57 : vector<8x384xf32>
    %59 = vector.extract_strided_slice %52 {offsets = [0, 384], sizes = [8, 128], strides = [1, 1]} : vector<8x512xf32> to vector<8x128xf32>
    %60 = math.tanh %59 : vector<8x128xf32>
    %61 = vector.extract_strided_slice %58 {offsets = [0, 0], sizes = [8, 128], strides = [1, 1]} : vector<8x384xf32> to vector<8x128xf32>
    %62 = vector.extract_strided_slice %58 {offsets = [0, 128], sizes = [8, 128], strides = [1, 1]} : vector<8x384xf32> to vector<8x128xf32>
    %63 = vector.extract_strided_slice %58 {offsets = [0, 256], sizes = [8, 128], strides = [1, 1]} : vector<8x384xf32> to vector<8x128xf32>
    %64 = arith.mulf %62, %46 : vector<8x128xf32>
    %65 = arith.mulf %61, %60 : vector<8x128xf32>
    %66 = arith.addf %64, %65 : vector<8x128xf32>
    %67 = math.tanh %66 : vector<8x128xf32>
    %68 = arith.mulf %63, %67 : vector<8x128xf32>
    %c16 = arith.constant 16 : index
    %c0_18 = arith.constant 0 : index
    %69 = vector.load %arg7[%c16, %c0_18] : memref<64x128xf32, #tpu.memory_space<vmem>>, vector<8x128xf32>
    tpu.vector_store %arg7[%c16, %c0_18], %68 {strides = array<i32>} : memref<64x128xf32, #tpu.memory_space<vmem>>, vector<8x128xf32>,
    %70 = arith.truncf %68 : vector<8x128xf32> to vector<8x128xbf16>
    %cst_19 = arith.constant dense<0.000000e+00> : vector<8x512xf32>
    %71 = tpu.matmul %70, %7, %cst_19 {dimension_numbers = #tpu.dot_dimension_numbers<[1], [0], [0], [1], [0, 0, 1, 1], [], []>} : vector<8x128xbf16>, vector<128x512xbf16>, vector<8x512xf32> -> vector<8x512xf32>
    %72 = arith.addf %6, %71 : vector<8x512xf32>
    %73 = vector.extract_strided_slice %72 {offsets = [0, 0], sizes = [8, 384], strides = [1, 1]} : vector<8x512xf32> to vector<8x384xf32>
    %74 = arith.negf %73 : vector<8x384xf32>
    %75 = math.exp %74 : vector<8x384xf32>
    %cst_20 = arith.constant 1.000000e+00 : f32
    %76 = vector.broadcast %cst_20 : f32 to vector<8x384xf32>
    %77 = arith.addf %76, %75 : vector<8x384xf32>
    %78 = arith.divf %76, %77 : vector<8x384xf32>
    %79 = vector.extract_strided_slice %72 {offsets = [0, 384], sizes = [8, 128], strides = [1, 1]} : vector<8x512xf32> to vector<8x128xf32>
    %80 = math.tanh %79 : vector<8x128xf32>
    %81 = vector.extract_strided_slice %78 {offsets = [0, 0], sizes = [8, 128], strides = [1, 1]} : vector<8x384xf32> to vector<8x128xf32>
    %82 = vector.extract_strided_slice %78 {offsets = [0, 128], sizes = [8, 128], strides = [1, 1]} : vector<8x384xf32> to vector<8x128xf32>
    %83 = vector.extract_strided_slice %78 {offsets = [0, 256], sizes = [8, 128], strides = [1, 1]} : vector<8x384xf32> to vector<8x128xf32>
    %84 = arith.mulf %82, %66 : vector<8x128xf32>
    %85 = arith.mulf %81, %80 : vector<8x128xf32>
    %86 = arith.addf %84, %85 : vector<8x128xf32>
    %87 = math.tanh %86 : vector<8x128xf32>
    %88 = arith.mulf %83, %87 : vector<8x128xf32>
    %c24 = arith.constant 24 : index
    %c0_21 = arith.constant 0 : index
    %89 = vector.load %arg7[%c24, %c0_21] : memref<64x128xf32, #tpu.memory_space<vmem>>, vector<8x128xf32>
    tpu.vector_store %arg7[%c24, %c0_21], %88 {strides = array<i32>} : memref<64x128xf32, #tpu.memory_space<vmem>>, vector<8x128xf32>,
    %90 = arith.truncf %88 : vector<8x128xf32> to vector<8x128xbf16>
    %cst_22 = arith.constant dense<0.000000e+00> : vector<8x512xf32>
    %91 = tpu.matmul %90, %7, %cst_22 {dimension_numbers = #tpu.dot_dimension_numbers<[1], [0], [0], [1], [0, 0, 1, 1], [], []>} : vector<8x128xbf16>, vector<128x512xbf16>, vector<8x512xf32> -> vector<8x512xf32>
    %92 = arith.addf %6, %91 : vector<8x512xf32>
    %93 = vector.extract_strided_slice %92 {offsets = [0, 0], sizes = [8, 384], strides = [1, 1]} : vector<8x512xf32> to vector<8x384xf32>
    %94 = arith.negf %93 : vector<8x384xf32>
    %95 = math.exp %94 : vector<8x384xf32>
    %cst_23 = arith.constant 1.000000e+00 : f32
    %96 = vector.broadcast %cst_23 : f32 to vector<8x384xf32>
    %97 = arith.addf %96, %95 : vector<8x384xf32>
    %98 = arith.divf %96, %97 : vector<8x384xf32>
    %99 = vector.extract_strided_slice %92 {offsets = [0, 384], sizes = [8, 128], strides = [1, 1]} : vector<8x512xf32> to vector<8x128xf32>
    %100 = math.tanh %99 : vector<8x128xf32>
    %101 = vector.extract_strided_slice %98 {offsets = [0, 0], sizes = [8, 128], strides = [1, 1]} : vector<8x384xf32> to vector<8x128xf32>
    %102 = vector.extract_strided_slice %98 {offsets = [0, 128], sizes = [8, 128], strides = [1, 1]} : vector<8x384xf32> to vector<8x128xf32>
    %103 = vector.extract_strided_slice %98 {offsets = [0, 256], sizes = [8, 128], strides = [1, 1]} : vector<8x384xf32> to vector<8x128xf32>
    %104 = arith.mulf %102, %86 : vector<8x128xf32>
    %105 = arith.mulf %101, %100 : vector<8x128xf32>
    %106 = arith.addf %104, %105 : vector<8x128xf32>
    %107 = math.tanh %106 : vector<8x128xf32>
    %108 = arith.mulf %103, %107 : vector<8x128xf32>
    %c32 = arith.constant 32 : index
    %c0_24 = arith.constant 0 : index
    %109 = vector.load %arg7[%c32, %c0_24] : memref<64x128xf32, #tpu.memory_space<vmem>>, vector<8x128xf32>
    tpu.vector_store %arg7[%c32, %c0_24], %108 {strides = array<i32>} : memref<64x128xf32, #tpu.memory_space<vmem>>, vector<8x128xf32>,
    %110 = arith.truncf %108 : vector<8x128xf32> to vector<8x128xbf16>
    %cst_25 = arith.constant dense<0.000000e+00> : vector<8x512xf32>
    %111 = tpu.matmul %110, %7, %cst_25 {dimension_numbers = #tpu.dot_dimension_numbers<[1], [0], [0], [1], [0, 0, 1, 1], [], []>} : vector<8x128xbf16>, vector<128x512xbf16>, vector<8x512xf32> -> vector<8x512xf32>
    %112 = arith.addf %6, %111 : vector<8x512xf32>
    %113 = vector.extract_strided_slice %112 {offsets = [0, 0], sizes = [8, 384], strides = [1, 1]} : vector<8x512xf32> to vector<8x384xf32>
    %114 = arith.negf %113 : vector<8x384xf32>
    %115 = math.exp %114 : vector<8x384xf32>
    %cst_26 = arith.constant 1.000000e+00 : f32
    %116 = vector.broadcast %cst_26 : f32 to vector<8x384xf32>
    %117 = arith.addf %116, %115 : vector<8x384xf32>
    %118 = arith.divf %116, %117 : vector<8x384xf32>
    %119 = vector.extract_strided_slice %112 {offsets = [0, 384], sizes = [8, 128], strides = [1, 1]} : vector<8x512xf32> to vector<8x128xf32>
    %120 = math.tanh %119 : vector<8x128xf32>
    %121 = vector.extract_strided_slice %118 {offsets = [0, 0], sizes = [8, 128], strides = [1, 1]} : vector<8x384xf32> to vector<8x128xf32>
    %122 = vector.extract_strided_slice %118 {offsets = [0, 128], sizes = [8, 128], strides = [1, 1]} : vector<8x384xf32> to vector<8x128xf32>
    %123 = vector.extract_strided_slice %118 {offsets = [0, 256], sizes = [8, 128], strides = [1, 1]} : vector<8x384xf32> to vector<8x128xf32>
    %124 = arith.mulf %122, %106 : vector<8x128xf32>
    %125 = arith.mulf %121, %120 : vector<8x128xf32>
    %126 = arith.addf %124, %125 : vector<8x128xf32>
    %127 = math.tanh %126 : vector<8x128xf32>
    %128 = arith.mulf %123, %127 : vector<8x128xf32>
    %c40 = arith.constant 40 : index
    %c0_27 = arith.constant 0 : index
    %129 = vector.load %arg7[%c40, %c0_27] : memref<64x128xf32, #tpu.memory_space<vmem>>, vector<8x128xf32>
    tpu.vector_store %arg7[%c40, %c0_27], %128 {strides = array<i32>} : memref<64x128xf32, #tpu.memory_space<vmem>>, vector<8x128xf32>,
    %130 = arith.truncf %128 : vector<8x128xf32> to vector<8x128xbf16>
    %cst_28 = arith.constant dense<0.000000e+00> : vector<8x512xf32>
    %131 = tpu.matmul %130, %7, %cst_28 {dimension_numbers = #tpu.dot_dimension_numbers<[1], [0], [0], [1], [0, 0, 1, 1], [], []>} : vector<8x128xbf16>, vector<128x512xbf16>, vector<8x512xf32> -> vector<8x512xf32>
    %132 = arith.addf %6, %131 : vector<8x512xf32>
    %133 = vector.extract_strided_slice %132 {offsets = [0, 0], sizes = [8, 384], strides = [1, 1]} : vector<8x512xf32> to vector<8x384xf32>
    %134 = arith.negf %133 : vector<8x384xf32>
    %135 = math.exp %134 : vector<8x384xf32>
    %cst_29 = arith.constant 1.000000e+00 : f32
    %136 = vector.broadcast %cst_29 : f32 to vector<8x384xf32>
    %137 = arith.addf %136, %135 : vector<8x384xf32>
    %138 = arith.divf %136, %137 : vector<8x384xf32>
    %139 = vector.extract_strided_slice %132 {offsets = [0, 384], sizes = [8, 128], strides = [1, 1]} : vector<8x512xf32> to vector<8x128xf32>
    %140 = math.tanh %139 : vector<8x128xf32>
    %141 = vector.extract_strided_slice %138 {offsets = [0, 0], sizes = [8, 128], strides = [1, 1]} : vector<8x384xf32> to vector<8x128xf32>
    %142 = vector.extract_strided_slice %138 {offsets = [0, 128], sizes = [8, 128], strides = [1, 1]} : vector<8x384xf32> to vector<8x128xf32>
    %143 = vector.extract_strided_slice %138 {offsets = [0, 256], sizes = [8, 128], strides = [1, 1]} : vector<8x384xf32> to vector<8x128xf32>
    %144 = arith.mulf %142, %126 : vector<8x128xf32>
    %145 = arith.mulf %141, %140 : vector<8x128xf32>
    %146 = arith.addf %144, %145 : vector<8x128xf32>
    %147 = math.tanh %146 : vector<8x128xf32>
    %148 = arith.mulf %143, %147 : vector<8x128xf32>
    %c48 = arith.constant 48 : index
    %c0_30 = arith.constant 0 : index
    %149 = vector.load %arg7[%c48, %c0_30] : memref<64x128xf32, #tpu.memory_space<vmem>>, vector<8x128xf32>
    tpu.vector_store %arg7[%c48, %c0_30], %148 {strides = array<i32>} : memref<64x128xf32, #tpu.memory_space<vmem>>, vector<8x128xf32>,
    %150 = arith.truncf %148 : vector<8x128xf32> to vector<8x128xbf16>
    %cst_31 = arith.constant dense<0.000000e+00> : vector<8x512xf32>
    %151 = tpu.matmul %150, %7, %cst_31 {dimension_numbers = #tpu.dot_dimension_numbers<[1], [0], [0], [1], [0, 0, 1, 1], [], []>} : vector<8x128xbf16>, vector<128x512xbf16>, vector<8x512xf32> -> vector<8x512xf32>
    %152 = arith.addf %6, %151 : vector<8x512xf32>
    %153 = vector.extract_strided_slice %152 {offsets = [0, 0], sizes = [8, 384], strides = [1, 1]} : vector<8x512xf32> to vector<8x384xf32>
    %154 = arith.negf %153 : vector<8x384xf32>
    %155 = math.exp %154 : vector<8x384xf32>
    %cst_32 = arith.constant 1.000000e+00 : f32
    %156 = vector.broadcast %cst_32 : f32 to vector<8x384xf32>
    %157 = arith.addf %156, %155 : vector<8x384xf32>
    %158 = arith.divf %156, %157 : vector<8x384xf32>
    %159 = vector.extract_strided_slice %152 {offsets = [0, 384], sizes = [8, 128], strides = [1, 1]} : vector<8x512xf32> to vector<8x128xf32>
    %160 = math.tanh %159 : vector<8x128xf32>
    %161 = vector.extract_strided_slice %158 {offsets = [0, 0], sizes = [8, 128], strides = [1, 1]} : vector<8x384xf32> to vector<8x128xf32>
    %162 = vector.extract_strided_slice %158 {offsets = [0, 128], sizes = [8, 128], strides = [1, 1]} : vector<8x384xf32> to vector<8x128xf32>
    %163 = vector.extract_strided_slice %158 {offsets = [0, 256], sizes = [8, 128], strides = [1, 1]} : vector<8x384xf32> to vector<8x128xf32>
    %164 = arith.mulf %162, %146 : vector<8x128xf32>
    %165 = arith.mulf %161, %160 : vector<8x128xf32>
    %166 = arith.addf %164, %165 : vector<8x128xf32>
    %167 = math.tanh %166 : vector<8x128xf32>
    %168 = arith.mulf %163, %167 : vector<8x128xf32>
    %c56 = arith.constant 56 : index
    %c0_33 = arith.constant 0 : index
    %169 = vector.load %arg7[%c56, %c0_33] : memref<64x128xf32, #tpu.memory_space<vmem>>, vector<8x128xf32>
    tpu.vector_store %arg7[%c56, %c0_33], %168 {strides = array<i32>} : memref<64x128xf32, #tpu.memory_space<vmem>>, vector<8x128xf32>,
    %c0_34 = arith.constant 0 : index
    %c0_35 = arith.constant 0 : index
    %170 = vector.load %arg7[%c0_34, %c0_35] : memref<64x128xf32, #tpu.memory_space<vmem>>, vector<64x128xf32>
    %171 = arith.truncf %170 : vector<64x128xf32> to vector<64x128xbf16>
    %c0_36 = arith.constant 0 : index
    %c0_37 = arith.constant 0 : index
    %172 = vector.load %arg4[%c0_36, %c0_37] : memref<128x128xbf16, #tpu.memory_space<vmem>>, vector<128x128xbf16>
    %cst_38 = arith.constant dense<0.000000e+00> : vector<64x128xf32>
    %173 = tpu.matmul %171, %172, %cst_38 {dimension_numbers = #tpu.dot_dimension_numbers<[1], [0], [0], [1], [0, 0, 1, 1], [], []>} : vector<64x128xbf16>, vector<128x128xbf16>, vector<64x128xf32> -> vector<64x128xf32>
    %c0_39 = arith.constant 0 : index
    %c0_40 = arith.constant 0 : index
    %174 = vector.load %arg5[%c0_39, %c0_40] : memref<1x128xf32, #tpu.memory_space<vmem>>, vector<1x128xf32>
    %175 = vector.broadcast %174 : vector<1x128xf32> to vector<64x128xf32>
    %176 = arith.addf %173, %175 : vector<64x128xf32>
    %177 = tpu.iota {dimensions = array<i32: 1>} : vector<64x128xi32>
    %c8_i32 = arith.constant 8 : i32
    %178 = vector.broadcast %c8_i32 : i32 to vector<64x128xi32>
    %179 = arith.cmpi slt, %177, %178 : vector<64x128xi32>
    %cst_41 = arith.constant -1.000000e+30 : f32
    %180 = vector.broadcast %cst_41 : f32 to vector<64x128xf32>
    %181 = arith.select %179, %176, %180 : vector<64x128xi1>, vector<64x128xf32>
    %cst_42 = arith.constant dense<0xFF800000> : vector<64xf32>
    %182 = vector.multi_reduction <maximumf>, %181, %cst_42 [1] : vector<64x128xf32> to vector<64xf32>
    %183 = vector.shape_cast %182 : vector<64xf32> to vector<64x1xf32>
    %184 = vector.broadcast %183 : vector<64x1xf32> to vector<64x128xf32>
    %185 = arith.subf %181, %184 : vector<64x128xf32>
    %186 = math.exp %185 : vector<64x128xf32>
    %187 = vector.broadcast %183 : vector<64x1xf32> to vector<64x128xf32>
    %188 = arith.subf %181, %187 : vector<64x128xf32>
    %cst_43 = arith.constant dense<0.000000e+00> : vector<64xf32>
    %189 = vector.multi_reduction <add>, %186, %cst_43 [1] : vector<64x128xf32> to vector<64xf32>
    %190 = vector.shape_cast %189 : vector<64xf32> to vector<64x1xf32>
    %191 = math.log %190 : vector<64x1xf32>
    %192 = vector.broadcast %191 : vector<64x1xf32> to vector<64x128xf32>
    %193 = arith.subf %188, %192 : vector<64x128xf32>
    %c0_44 = arith.constant 0 : index
    %c0_45 = arith.constant 0 : index
    %194 = vector.load %arg6[%c0_44, %c0_45] : memref<64x128xf32, #tpu.memory_space<vmem>>, vector<64x128xf32>
    tpu.vector_store %arg6[%c0_44, %c0_45], %193 {strides = array<i32>} : memref<64x128xf32, #tpu.memory_space<vmem>>, vector<64x128xf32>,
    return
  }
}

</mosaic_0001>

<llo_original>
// kernel: decoder_forward.1
$region0: #{decoder_forward.1}
  #allocation0 [shape = 'u32[]', space=smem, size = 0x4, offset = 0x4, fixed_abs, tag = 'smem constant byte address 0x4 - core index']
  #allocation1 [shape = 'u32[144,128]{1,0:T(1,128)}', space=vmem, size = 0x12000, scoped, tag = 'internal scratch']
  #allocation2 [shape = 'f32[64,128]{1,0:T(8,128)}', space=vmem, size = 0x8000, scoped, tag = 'scratch operand']
  %s0 = inlined_call_operand.vmem [shape: f32[8,128], index: 0, kind: input, shape index: {}]
  %s1 = inlined_call_operand.hbm [shape: bf16[128,512], index: 1, kind: input, shape index: {}]
  %s2 = inlined_call_operand.hbm [shape: bf16[128,512], index: 2, kind: input, shape index: {}]
  %s3 = inlined_call_operand.vmem [shape: f32[1,512], index: 3, kind: input, shape index: {}]
  %s4 = inlined_call_operand.hbm [shape: bf16[128,128], index: 4, kind: input, shape index: {}]
  %s5 = inlined_call_operand.vmem [shape: f32[1,128], index: 5, kind: input, shape index: {}]
  %s6 = inlined_call_operand.vmem [shape: f32[64,128], index: 6, kind: output, shape index: {}]
  %s7 = sld [smem:[#allocation0]]
  $region46: #{decoder_forward.1} parent=0
    _
  %s9 = ssub.s32 1, %s7
  %s10 = scalar_select 0, %s9, %s7
  $region1: #{decoder_forward.1} parent=0
    #allocation3 [shape = 'u8[131072]{0}', space=vmem, size = 0x20000, scoped, tag = 'input window, operand 1, single buffered']
    #allocation4 [shape = 's32[1]{0}', space=sflag, size = 0x4, scoped, tag = 'scoped memory for decoder_forward.1']
    #allocation5 [shape = 'u8[131072]{0}', space=vmem, size = 0x20000, scoped, tag = 'input window, operand 2, single buffered']
    #allocation6 [shape = 's32[1]{0}', space=sflag, size = 0x4, scoped, tag = 'scoped memory for decoder_forward.1']
    #allocation7 [shape = 'u8[32768]{0}', space=vmem, size = 0x8000, scoped, tag = 'input window, operand 4, single buffered']
    %11 = vsyncpa [#allocation4], 0
    %12 = vsyncpa [#allocation6], 0
    // Predicated region
    $region2: #{decoder_forward.1} parent=1 // pred_check
      _
    $region3: #{decoder_forward.1} parent=1 // pred_check_branch
      %14 = sbr.rel (0) target = $region5
    $region4: #{decoder_forward.1} parent=1 // pred_region
      _
    $region5: #{decoder_forward.1} parent=1 // pred_fallthru
      _
    // Predicated region
    $region6: #{decoder_forward.1} parent=1 // pred_check
      _
    $region7: #{decoder_forward.1} parent=1 // pred_check_branch
      %16 = sbr.rel (0) target = $region9
    $region8: #{decoder_forward.1} parent=1 // pred_region
      %s18 = ssub.s32 4096, 4096
      %19 = vsyncadd [#allocation4], %s18
      %s20 = sshll.u32 [#allocation3], 4
      %s21 = int_to_ptr.vmem [resolvable:$true] %s20
      %26 = dma.hbm_to_vmem [thread:$0]  %s1, 4096, %s21, [#allocation4], 256, 256, 16
    $region9: #{decoder_forward.1} parent=1 // pred_fallthru
      _
    // Predicated region
    $region10: #{decoder_forward.1} parent=1 // pred_check
      _
    $region11: #{decoder_forward.1} parent=1 // pred_check_branch
      %28 = sbr.rel (0) target = $region13
    $region12: #{decoder_forward.1} parent=1 // pred_region
      %s30 = ssub.s32 4096, 4096
      %31 = vsyncadd [#allocation6], %s30
      %s32 = sshll.u32 [#allocation5], 4
      %s33 = int_to_ptr.vmem [resolvable:$true] %s32
      %38 = dma.hbm_to_vmem [thread:$0]  %s2, 4096, %s33, [#allocation6], 256, 256, 16
    $region13: #{decoder_forward.1} parent=1 // pred_fallthru
      _
    // Predicated region
    $region14: #{decoder_forward.1} parent=1 // pred_check
      _
    $region15: #{decoder_forward.1} parent=1 // pred_check_branch
      %40 = sbr.rel (0) target = $region17
    $region16: #{decoder_forward.1} parent=1 // pred_region
      _
    $region17: #{decoder_forward.1} parent=1 // pred_fallthru
      _
    // Predicated region
    $region18: #{decoder_forward.1} parent=1 // pred_check
      _
    $region19: #{decoder_forward.1} parent=1 // pred_check_branch
      %42 = sbr.rel (0) target = $region21
    $region20: #{decoder_forward.1} parent=1 // pred_region
      %s44 = ssub.s32 1024, 1024
      %45 = vsyncadd [#allocation6], %s44
      %s46 = sshll.u32 [#allocation7], 4
      %s47 = int_to_ptr.vmem [resolvable:$true] %s46
      %52 = dma.hbm_to_vmem [thread:$0]  %s4, 1024, %s47, [#allocation6], 64, 64, 4
    $region21: #{decoder_forward.1} parent=1 // pred_fallthru
      _
    // Predicated region
    $region22: #{decoder_forward.1} parent=1 // pred_check
      _
    $region23: #{decoder_forward.1} parent=1 // pred_check_branch
      %54 = sbr.rel (0) target = $region25
    $region24: #{decoder_forward.1} parent=1 // pred_region
      _
    $region25: #{decoder_forward.1} parent=1 // pred_fallthru
      _
    // Predicated region
    $region26: #{decoder_forward.1} parent=1 // pred_check
      _
    $region27: #{decoder_forward.1} parent=1 // pred_check_branch
      %56 = sbr.rel (0) target = $region29
    $region28: #{decoder_forward.1} parent=1 // pred_region
      %57 = dma.done [#allocation4], 4096
    $region29: #{decoder_forward.1} parent=1 // pred_fallthru
      _
    // Predicated region
    $region30: #{decoder_forward.1} parent=1 // pred_check
      _
    $region31: #{decoder_forward.1} parent=1 // pred_check_branch
      %59 = sbr.rel (0) target = $region33
    $region32: #{decoder_forward.1} parent=1 // pred_region
      %60 = dma.done [#allocation6], 4096
    $region33: #{decoder_forward.1} parent=1 // pred_fallthru
      _
    // Predicated region
    $region34: #{decoder_forward.1} parent=1 // pred_check
      _
    $region35: #{decoder_forward.1} parent=1 // pred_check_branch
      %62 = sbr.rel (0) target = $region37
    $region36: #{decoder_forward.1} parent=1 // pred_region
      %63 = dma.done [#allocation6], 1024
    $region37: #{decoder_forward.1} parent=1 // pred_fallthru
      _
    %v65 = vld [vmem:[%s0] sm:$0xff]
    %v66 = vpack.c.bf16 %v65, %v65
    %v67 = vld [vmem:[#allocation3] sm:$0xff]
    %v68 = vld [vmem:[#allocation3 + $0x8] sm:$0xff]
    %v69 = vld [vmem:[#allocation3 + $0x10] sm:$0xff]
    %v70 = vld [vmem:[#allocation3 + $0x18] sm:$0xff]
    %v71 = vld [vmem:[#allocation3 + $0x20] sm:$0xff]
    %v72 = vld [vmem:[#allocation3 + $0x28] sm:$0xff]
    %v73 = vld [vmem:[#allocation3 + $0x30] sm:$0xff]
    %v74 = vld [vmem:[#allocation3 + $0x38] sm:$0xff]
    %v75 = vld [vmem:[#allocation3 + $0x40] sm:$0xff]
    %v76 = vld [vmem:[#allocation3 + $0x48] sm:$0xff]
    %v77 = vld [vmem:[#allocation3 + $0x50] sm:$0xff]
    %v78 = vld [vmem:[#allocation3 + $0x58] sm:$0xff]
    %v79 = vld [vmem:[#allocation3 + $0x60] sm:$0xff]
    %v80 = vld [vmem:[#allocation3 + $0x68] sm:$0xff]
    %v81 = vld [vmem:[#allocation3 + $0x70] sm:$0xff]
    %v82 = vld [vmem:[#allocation3 + $0x78] sm:$0xff]
    %v83 = vld [vmem:[#allocation3 + $0x80] sm:$0xff]
    %v84 = vld [vmem:[#allocation3 + $0x88] sm:$0xff]
    %v85 = vld [vmem:[#allocation3 + $0x90] sm:$0xff]
    %v86 = vld [vmem:[#allocation3 + $0x98] sm:$0xff]
    %v87 = vld [vmem:[#allocation3 + $0xa0] sm:$0xff]
    %v88 = vld [vmem:[#allocation3 + $0xa8] sm:$0xff]
    %v89 = vld [vmem:[#allocation3 + $0xb0] sm:$0xff]
    %v90 = vld [vmem:[#allocation3 + $0xb8] sm:$0xff]
    %v91 = vld [vmem:[#allocation3 + $0xc0] sm:$0xff]
    %v92 = vld [vmem:[#allocation3 + $0xc8] sm:$0xff]
    %v93 = vld [vmem:[#allocation3 + $0xd0] sm:$0xff]
    %v94 = vld [vmem:[#allocation3 + $0xd8] sm:$0xff]
    %v95 = vld [vmem:[#allocation3 + $0xe0] sm:$0xff]
    %v96 = vld [vmem:[#allocation3 + $0xe8] sm:$0xff]
    %v97 = vld [vmem:[#allocation3 + $0xf0] sm:$0xff]
    %v98 = vld [vmem:[#allocation3 + $0xf8] sm:$0xff]
    %v99 = vld [vmem:[%s3] sm:$0xf]
    %v101 = vlaneseq
    %v102 = vshrl.u32 %v101, 7
    %v103 = vsub.s32 0, %v102
    %v104 = vrot.slane %v99, %v103
    %v105 = vlaneseq
    %v106 = vshrl.u32 %v105, 7
    %v107 = vsub.s32 1, %v106
    %v108 = vrot.slane %v99, %v107
    %v109 = vlaneseq
    %v110 = vshrl.u32 %v109, 7
    %v111 = vsub.s32 2, %v110
    %v112 = vrot.slane %v99, %v111
    %v113 = vlaneseq
    %v114 = vshrl.u32 %v113, 7
    %v115 = vsub.s32 3, %v114
    %v116 = vrot.slane %v99, %v115
    %v153 = vunpack.c.l.b16 %v67
    %v154 = vunpack.c.h.b16 %v67
    %v155 = vunpack.c.l.b16 %v68
    %v156 = vunpack.c.h.b16 %v68
    %v157 = vunpack.c.l.b16 %v69
    %v158 = vunpack.c.h.b16 %v69
    %v159 = vunpack.c.l.b16 %v70
    %v160 = vunpack.c.h.b16 %v70
    %v161 = vunpack.c.l.b16 %v71
    %v162 = vunpack.c.h.b16 %v71
    %v163 = vunpack.c.l.b16 %v72
    %v164 = vunpack.c.h.b16 %v72
    %v165 = vunpack.c.l.b16 %v73
    %v166 = vunpack.c.h.b16 %v73
    %v167 = vunpack.c.l.b16 %v74
    %v168 = vunpack.c.h.b16 %v74
    %v169 = vunpack.c.l.b16 %v75
    %v170 = vunpack.c.h.b16 %v75
    %v171 = vunpack.c.l.b16 %v76
    %v172 = vunpack.c.h.b16 %v76
    %v173 = vunpack.c.l.b16 %v77
    %v174 = vunpack.c.h.b16 %v77
    %v175 = vunpack.c.l.b16 %v78
    %v176 = vunpack.c.h.b16 %v78
    %v177 = vunpack.c.l.b16 %v79
    %v178 = vunpack.c.h.b16 %v79
    %v179 = vunpack.c.l.b16 %v80
    %v180 = vunpack.c.h.b16 %v80
    %v181 = vunpack.c.l.b16 %v81
    %v182 = vunpack.c.h.b16 %v81
    %v183 = vunpack.c.l.b16 %v82
    %v184 = vunpack.c.h.b16 %v82
    %v185 = vunpack.c.l.b16 %v83
    %v186 = vunpack.c.h.b16 %v83
    %v187 = vunpack.c.l.b16 %v84
    %v188 = vunpack.c.h.b16 %v84
    %v189 = vunpack.c.l.b16 %v85
    %v190 = vunpack.c.h.b16 %v85
    %v191 = vunpack.c.l.b16 %v86
    %v192 = vunpack.c.h.b16 %v86
    %v193 = vunpack.c.l.b16 %v87
    %v194 = vunpack.c.h.b16 %v87
    %v195 = vunpack.c.l.b16 %v88
    %v196 = vunpack.c.h.b16 %v88
    %v197 = vunpack.c.l.b16 %v89
    %v198 = vunpack.c.h.b16 %v89
    %v199 = vunpack.c.l.b16 %v90
    %v200 = vunpack.c.h.b16 %v90
    %v201 = vunpack.c.l.b16 %v91
    %v202 = vunpack.c.h.b16 %v91
    %v203 = vunpack.c.l.b16 %v92
    %v204 = vunpack.c.h.b16 %v92
    %v205 = vunpack.c.l.b16 %v93
    %v206 = vunpack.c.h.b16 %v93
    %v207 = vunpack.c.l.b16 %v94
    %v208 = vunpack.c.h.b16 %v94
    %v209 = vunpack.c.l.b16 %v95
    %v210 = vunpack.c.h.b16 %v95
    %v211 = vunpack.c.l.b16 %v96
    %v212 = vunpack.c.h.b16 %v96
    %v213 = vunpack.c.l.b16 %v97
    %v214 = vunpack.c.h.b16 %v97
    %v215 = vunpack.c.l.b16 %v98
    %v216 = vunpack.c.h.b16 %v98
    %v217 = vpack.c.b16 %v157, %v153
    %v218 = vpack.c.b16 %v158, %v154
    %v219 = vpack.c.b16 %v159, %v155
    %v220 = vpack.c.b16 %v160, %v156
    %v221 = vpack.c.b16 %v165, %v161
    %v222 = vpack.c.b16 %v166, %v162
    %v223 = vpack.c.b16 %v167, %v163
    %v224 = vpack.c.b16 %v168, %v164
    %v225 = vpack.c.b16 %v173, %v169
    %v226 = vpack.c.b16 %v174, %v170
    %v227 = vpack.c.b16 %v175, %v171
    %v228 = vpack.c.b16 %v176, %v172
    %v229 = vpack.c.b16 %v181, %v177
    %v230 = vpack.c.b16 %v182, %v178
    %v231 = vpack.c.b16 %v183, %v179
    %v232 = vpack.c.b16 %v184, %v180
    %v233 = vpack.c.b16 %v189, %v185
    %v234 = vpack.c.b16 %v190, %v186
    %v235 = vpack.c.b16 %v191, %v187
    %v236 = vpack.c.b16 %v192, %v188
    %v237 = vpack.c.b16 %v197, %v193
    %v238 = vpack.c.b16 %v198, %v194
    %v239 = vpack.c.b16 %v199, %v195
    %v240 = vpack.c.b16 %v200, %v196
    %v241 = vpack.c.b16 %v205, %v201
    %v242 = vpack.c.b16 %v206, %v202
    %v243 = vpack.c.b16 %v207, %v203
    %v244 = vpack.c.b16 %v208, %v204
    %v245 = vpack.c.b16 %v213, %v209
    %v246 = vpack.c.b16 %v214, %v210
    %v247 = vpack.c.b16 %v215, %v211
    %v248 = vpack.c.b16 %v216, %v212
    %281 = vmatprep.subr.bf16.mxu0 %v218
    %282 = vmatpush1.bf16.msra.mxu0 %v217
    %283 = vmatprep.subr.bf16.mxu0 %v222
    %284 = vmatpush1.bf16.msra.mxu0 %v221
    %285 = vmatprep.subr.bf16.mxu0 %v226
    %286 = vmatpush1.bf16.msra.mxu0 %v225
    %287 = vmatprep.subr.bf16.mxu0 %v230
    %288 = vmatpush1.bf16.msra.mxu0 %v229
    %289 = vmatprep.subr.bf16.mxu0 %v234
    %290 = vmatpush1.bf16.msra.mxu0 %v233
    %291 = vmatprep.subr.bf16.mxu0 %v238
    %292 = vmatpush1.bf16.msra.mxu0 %v237
    %293 = vmatprep.subr.bf16.mxu0 %v242
    %294 = vmatpush1.bf16.msra.mxu0 %v241
    %295 = vmatprep.subr.bf16.mxu0 %v246
    %296 = vmatpush1.bf16.msra.mxu0 %v245
    %297 = vmatprep.subr.bf16.mxu0 0
    %298 = vmatpush1.bf16.msra.mxu0 0
    %299 = vmatprep.subr.bf16.mxu0 0
    %300 = vmatpush1.bf16.msra.mxu0 0
    %301 = vmatprep.subr.bf16.mxu0 0
    %302 = vmatpush1.bf16.msra.mxu0 0
    %303 = vmatprep.subr.bf16.mxu0 0
    %304 = vmatpush1.bf16.msra.mxu0 0
    %305 = vmatprep.subr.bf16.mxu0 0
    %306 = vmatpush1.bf16.msra.mxu0 0
    %307 = vmatprep.subr.bf16.mxu0 0
    %308 = vmatpush1.bf16.msra.mxu0 0
    %309 = vmatprep.subr.bf16.mxu0 0
    %310 = vmatpush1.bf16.msra.mxu0 0
    %311 = vmatprep.subr.bf16.mxu0 0
    %312 = vmatpush1.bf16.msra.mxu0 0
    %313 = vmatprep.mubr.bf16.mxu0 0
    %314 = vmatmul.mubr.bf16.gmra.mrb[0].mxu0 %v66
    %v315 = vpop.f32.mrb[0].mxu0
    %v316 = vadd.f32 %v104, %v315
    %v317 = vpop.f32.mrb[0].mxu0
    %v318 = vadd.f32 %v108, %v317
    %v319 = vpop.f32.mrb[0].mxu0
    %v320 = vpop.f32.mrb[0].mxu0
    %321 = vdwg.mxu0
    %322 = vmatprep.subr.bf16.mxu0 %v220
    %323 = vmatpush1.bf16.msra.mxu0 %v219
    %324 = vmatprep.subr.bf16.mxu0 %v224
    %325 = vmatpush1.bf16.msra.mxu0 %v223
    %326 = vmatprep.subr.bf16.mxu0 %v228
    %327 = vmatpush1.bf16.msra.mxu0 %v227
    %328 = vmatprep.subr.bf16.mxu0 %v232
    %329 = vmatpush1.bf16.msra.mxu0 %v231
    %330 = vmatprep.subr.bf16.mxu0 %v236
    %331 = vmatpush1.bf16.msra.mxu0 %v235
    %332 = vmatprep.subr.bf16.mxu0 %v240
    %333 = vmatpush1.bf16.msra.mxu0 %v239
    %334 = vmatprep.subr.bf16.mxu0 %v244
    %335 = vmatpush1.bf16.msra.mxu0 %v243
    %336 = vmatprep.subr.bf16.mxu0 %v248
    %337 = vmatpush1.bf16.msra.mxu0 %v247
    %338 = vmatprep.subr.bf16.mxu0 0
    %339 = vmatpush1.bf16.msra.mxu0 0
    %340 = vmatprep.subr.bf16.mxu0 0
    %341 = vmatpush1.bf16.msra.mxu0 0
    %342 = vmatprep.subr.bf16.mxu0 0
    %343 = vmatpush1.bf16.msra.mxu0 0
    %344 = vmatprep.subr.bf16.mxu0 0
    %345 = vmatpush1.bf16.msra.mxu0 0
    %346 = vmatprep.subr.bf16.mxu0 0
    %347 = vmatpush1.bf16.msra.mxu0 0
    %348 = vmatprep.subr.bf16.mxu0 0
    %349 = vmatpush1.bf16.msra.mxu0 0
    %350 = vmatprep.subr.bf16.mxu0 0
    %351 = vmatpush1.bf16.msra.mxu0 0
    %352 = vmatprep.subr.bf16.mxu0 0
    %353 = vmatpush1.bf16.msra.mxu0 0
    %354 = vmatprep.mubr.bf16.mxu0 0
    %355 = vmatmul.mubr.bf16.gmra.mrb[0].mxu0 %v66
    %v356 = vpop.f32.mrb[0].mxu0
    %v357 = vadd.f32 %v112, %v356
    %v358 = vpop.f32.mrb[0].mxu0
    %v359 = vadd.f32 %v116, %v358
    %v360 = vpop.f32.mrb[0].mxu0
    %v361 = vpop.f32.mrb[0].mxu0
    %362 = vdwg.mxu0
    %v363 = vld [vmem:[#allocation5] sm:$0xff]
    %v364 = vld [vmem:[#allocation5 + $0x8] sm:$0xff]
    %v365 = vld [vmem:[#allocation5 + $0x10] sm:$0xff]
    %v366 = vld [vmem:[#allocation5 + $0x18] sm:$0xff]
    %v367 = vld [vmem:[#allocation5 + $0x20] sm:$0xff]
    %v368 = vld [vmem:[#allocation5 + $0x28] sm:$0xff]
    %v369 = vld [vmem:[#allocation5 + $0x30] sm:$0xff]
    %v370 = vld [vmem:[#allocation5 + $0x38] sm:$0xff]
    %v371 = vld [vmem:[#allocation5 + $0x40] sm:$0xff]
    %v372 = vld [vmem:[#allocation5 + $0x48] sm:$0xff]
    %v373 = vld [vmem:[#allocation5 + $0x50] sm:$0xff]
    %v374 = vld [vmem:[#allocation5 + $0x58] sm:$0xff]
    %v375 = vld [vmem:[#allocation5 + $0x60] sm:$0xff]
    %v376 = vld [vmem:[#allocation5 + $0x68] sm:$0xff]
    %v377 = vld [vmem:[#allocation5 + $0x70] sm:$0xff]
    %v378 = vld [vmem:[#allocation5 + $0x78] sm:$0xff]
    %v379 = vld [vmem:[#allocation5 + $0x80] sm:$0xff]
    %v380 = vld [vmem:[#allocation5 + $0x88] sm:$0xff]
    %v381 = vld [vmem:[#allocation5 + $0x90] sm:$0xff]
    %v382 = vld [vmem:[#allocation5 + $0x98] sm:$0xff]
    %v383 = vld [vmem:[#allocation5 + $0xa0] sm:$0xff]
    %v384 = vld [vmem:[#allocation5 + $0xa8] sm:$0xff]
    %v385 = vld [vmem:[#allocation5 + $0xb0] sm:$0xff]
    %v386 = vld [vmem:[#allocation5 + $0xb8] sm:$0xff]
    %v387 = vld [vmem:[#allocation5 + $0xc0] sm:$0xff]
    %v388 = vld [vmem:[#allocation5 + $0xc8] sm:$0xff]
    %v389 = vld [vmem:[#allocation5 + $0xd0] sm:$0xff]
    %v390 = vld [vmem:[#allocation5 + $0xd8] sm:$0xff]
    %v391 = vld [vmem:[#allocation5 + $0xe0] sm:$0xff]
    %v392 = vld [vmem:[#allocation5 + $0xe8] sm:$0xff]
    %v393 = vld [vmem:[#allocation5 + $0xf0] sm:$0xff]
    %v394 = vld [vmem:[#allocation5 + $0xf8] sm:$0xff]
    %v427 = vunpack.c.l.b16 %v363
    %v428 = vunpack.c.h.b16 %v363
    %v429 = vunpack.c.l.b16 %v364
    %v430 = vunpack.c.h.b16 %v364
    %v431 = vunpack.c.l.b16 %v365
    %v432 = vunpack.c.h.b16 %v365
    %v433 = vunpack.c.l.b16 %v366
    %v434 = vunpack.c.h.b16 %v366
    %v435 = vunpack.c.l.b16 %v367
    %v436 = vunpack.c.h.b16 %v367
    %v437 = vunpack.c.l.b16 %v368
    %v438 = vunpack.c.h.b16 %v368
    %v439 = vunpack.c.l.b16 %v369
    %v440 = vunpack.c.h.b16 %v369
    %v441 = vunpack.c.l.b16 %v370
    %v442 = vunpack.c.h.b16 %v370
    %v443 = vunpack.c.l.b16 %v371
    %v444 = vunpack.c.h.b16 %v371
    %v445 = vunpack.c.l.b16 %v372
    %v446 = vunpack.c.h.b16 %v372
    %v447 = vunpack.c.l.b16 %v373
    %v448 = vunpack.c.h.b16 %v373
    %v449 = vunpack.c.l.b16 %v374
    %v450 = vunpack.c.h.b16 %v374
    %v451 = vunpack.c.l.b16 %v375
    %v452 = vunpack.c.h.b16 %v375
    %v453 = vunpack.c.l.b16 %v376
    %v454 = vunpack.c.h.b16 %v376
    %v455 = vunpack.c.l.b16 %v377
    %v456 = vunpack.c.h.b16 %v377
    %v457 = vunpack.c.l.b16 %v378
    %v458 = vunpack.c.h.b16 %v378
    %v459 = vunpack.c.l.b16 %v379
    %v460 = vunpack.c.h.b16 %v379
    %v461 = vunpack.c.l.b16 %v380
    %v462 = vunpack.c.h.b16 %v380
    %v463 = vunpack.c.l.b16 %v381
    %v464 = vunpack.c.h.b16 %v381
    %v465 = vunpack.c.l.b16 %v382
    %v466 = vunpack.c.h.b16 %v382
    %v467 = vunpack.c.l.b16 %v383
    %v468 = vunpack.c.h.b16 %v383
    %v469 = vunpack.c.l.b16 %v384
    %v470 = vunpack.c.h.b16 %v384
    %v471 = vunpack.c.l.b16 %v385
    %v472 = vunpack.c.h.b16 %v385
    %v473 = vunpack.c.l.b16 %v386
    %v474 = vunpack.c.h.b16 %v386
    %v475 = vunpack.c.l.b16 %v387
    %v476 = vunpack.c.h.b16 %v387
    %v477 = vunpack.c.l.b16 %v388
    %v478 = vunpack.c.h.b16 %v388
    %v479 = vunpack.c.l.b16 %v389
    %v480 = vunpack.c.h.b16 %v389
    %v481 = vunpack.c.l.b16 %v390
    %v482 = vunpack.c.h.b16 %v390
    %v483 = vunpack.c.l.b16 %v391
    %v484 = vunpack.c.h.b16 %v391
    %v485 = vunpack.c.l.b16 %v392
    %v486 = vunpack.c.h.b16 %v392
    %v487 = vunpack.c.l.b16 %v393
    %v488 = vunpack.c.h.b16 %v393
    %v489 = vunpack.c.l.b16 %v394
    %v490 = vunpack.c.h.b16 %v394
    %v491 = vpack.c.b16 %v431, %v427
    %v492 = vpack.c.b16 %v432, %v428
    %v493 = vpack.c.b16 %v433, %v429
    %v494 = vpack.c.b16 %v434, %v430
    %v495 = vpack.c.b16 %v439, %v435
    %v496 = vpack.c.b16 %v440, %v436
    %v497 = vpack.c.b16 %v441, %v437
    %v498 = vpack.c.b16 %v442, %v438
    %v499 = vpack.c.b16 %v447, %v443
    %v500 = vpack.c.b16 %v448, %v444
    %v501 = vpack.c.b16 %v449, %v445
    %v502 = vpack.c.b16 %v450, %v446
    %v503 = vpack.c.b16 %v455, %v451
    %v504 = vpack.c.b16 %v456, %v452
    %v505 = vpack.c.b16 %v457, %v453
    %v506 = vpack.c.b16 %v458, %v454
    %v507 = vpack.c.b16 %v463, %v459
    %v508 = vpack.c.b16 %v464, %v460
    %v509 = vpack.c.b16 %v465, %v461
    %v510 = vpack.c.b16 %v466, %v462
    %v511 = vpack.c.b16 %v471, %v467
    %v512 = vpack.c.b16 %v472, %v468
    %v513 = vpack.c.b16 %v473, %v469
    %v514 = vpack.c.b16 %v474, %v470
    %v515 = vpack.c.b16 %v479, %v475
    %v516 = vpack.c.b16 %v480, %v476
    %v517 = vpack.c.b16 %v481, %v477
    %v518 = vpack.c.b16 %v482, %v478
    %v519 = vpack.c.b16 %v487, %v483
    %v520 = vpack.c.b16 %v488, %v484
    %v521 = vpack.c.b16 %v489, %v485
    %v522 = vpack.c.b16 %v490, %v486
    %555 = vmatprep.subr.bf16.mxu0 %v492
    %556 = vmatpush1.bf16.msra.mxu0 %v491
    %557 = vmatprep.subr.bf16.mxu0 %v496
    %558 = vmatpush1.bf16.msra.mxu0 %v495
    %559 = vmatprep.subr.bf16.mxu0 %v500
    %560 = vmatpush1.bf16.msra.mxu0 %v499
    %561 = vmatprep.subr.bf16.mxu0 %v504
    %562 = vmatpush1.bf16.msra.mxu0 %v503
    %563 = vmatprep.subr.bf16.mxu0 %v508
    %564 = vmatpush1.bf16.msra.mxu0 %v507
    %565 = vmatprep.subr.bf16.mxu0 %v512
    %566 = vmatpush1.bf16.msra.mxu0 %v511
    %567 = vmatprep.subr.bf16.mxu0 %v516
    %568 = vmatpush1.bf16.msra.mxu0 %v515
    %569 = vmatprep.subr.bf16.mxu0 %v520
    %570 = vmatpush1.bf16.msra.mxu0 %v519
    %571 = vmatprep.subr.bf16.mxu0 0
    %572 = vmatpush1.bf16.msra.mxu0 0
    %573 = vmatprep.subr.bf16.mxu0 0
    %574 = vmatpush1.bf16.msra.mxu0 0
    %575 = vmatprep.subr.bf16.mxu0 0
    %576 = vmatpush1.bf16.msra.mxu0 0
    %577 = vmatprep.subr.bf16.mxu0 0
    %578 = vmatpush1.bf16.msra.mxu0 0
    %579 = vmatprep.subr.bf16.mxu0 0
    %580 = vmatpush1.bf16.msra.mxu0 0
    %581 = vmatprep.subr.bf16.mxu0 0
    %582 = vmatpush1.bf16.msra.mxu0 0
    %583 = vmatprep.subr.bf16.mxu0 0
    %584 = vmatpush1.bf16.msra.mxu0 0
    %585 = vmatprep.subr.bf16.mxu0 0
    %586 = vmatpush1.bf16.msra.mxu0 0
    %587 = vmatprep.mubr.bf16.mxu0 0
    %588 = vmatmul.mubr.bf16.gmra.mrb[0].mxu0 0
    %v589 = vpop.f32.mrb[0].mxu0
    %v590 = vadd.f32 0.0, %v589
    %v591 = vpop.f32.mrb[0].mxu0
    %v592 = vadd.f32 0.0, %v591
    %v593 = vpop.f32.mrb[0].mxu0
    %v594 = vpop.f32.mrb[0].mxu0
    %595 = vdwg.mxu0
    %596 = vmatprep.subr.bf16.mxu0 %v494
    %597 = vmatpush1.bf16.msra.mxu0 %v493
    %598 = vmatprep.subr.bf16.mxu0 %v498
    %599 = vmatpush1.bf16.msra.mxu0 %v497
    %600 = vmatprep.subr.bf16.mxu0 %v502
    %601 = vmatpush1.bf16.msra.mxu0 %v501
    %602 = vmatprep.subr.bf16.mxu0 %v506
    %603 = vmatpush1.bf16.msra.mxu0 %v505
    %604 = vmatprep.subr.bf16.mxu0 %v510
    %605 = vmatpush1.bf16.msra.mxu0 %v509
    %606 = vmatprep.subr.bf16.mxu0 %v514
    %607 = vmatpush1.bf16.msra.mxu0 %v513
    %608 = vmatprep.subr.bf16.mxu0 %v518
    %609 = vmatpush1.bf16.msra.mxu0 %v517
    %610 = vmatprep.subr.bf16.mxu0 %v522
    %611 = vmatpush1.bf16.msra.mxu0 %v521
    %612 = vmatprep.subr.bf16.mxu0 0
    %613 = vmatpush1.bf16.msra.mxu0 0
    %614 = vmatprep.subr.bf16.mxu0 0
    %615 = vmatpush1.bf16.msra.mxu0 0
    %616 = vmatprep.subr.bf16.mxu0 0
    %617 = vmatpush1.bf16.msra.mxu0 0
    %618 = vmatprep.subr.bf16.mxu0 0
    %619 = vmatpush1.bf16.msra.mxu0 0
    %620 = vmatprep.subr.bf16.mxu0 0
    %621 = vmatpush1.bf16.msra.mxu0 0
    %622 = vmatprep.subr.bf16.mxu0 0
    %623 = vmatpush1.bf16.msra.mxu0 0
    %624 = vmatprep.subr.bf16.mxu0 0
    %625 = vmatpush1.bf16.msra.mxu0 0
    %626 = vmatprep.subr.bf16.mxu0 0
    %627 = vmatpush1.bf16.msra.mxu0 0
    %628 = vmatprep.mubr.bf16.mxu0 0
    %629 = vmatmul.mubr.bf16.gmra.mrb[0].mxu0 0
    %v630 = vpop.f32.mrb[0].mxu0
    %v631 = vadd.f32 0.0, %v630
    %v632 = vpop.f32.mrb[0].mxu0
    %v633 = vadd.f32 0.0, %v632
    %v634 = vpop.f32.mrb[0].mxu0
    %v635 = vpop.f32.mrb[0].mxu0
    %636 = vdwg.mxu0
    %v637 = vadd.f32 %v316, %v590
    %v638 = vadd.f32 %v318, %v592
    %v639 = vadd.f32 %v357, %v631
    %v640 = vadd.f32 %v359, %v633
    %v641 = vxor.u32 %v637, 2147483648
    %v642 = vxor.u32 %v638, 2147483648
    %v643 = vxor.u32 %v639, 2147483648
    %v644 = vmul.f32 %v641, 1.442695
    %v645 = vpow.pop %v644
    %v646 = vmul.f32 %v642, 1.442695
    %v647 = vpow.pop %v646
    %v648 = vmul.f32 %v643, 1.442695
    %v649 = vpow.pop %v648
    %v650 = vadd.f32 %v645, 1.0
    %v651 = vadd.f32 %v647, 1.0
    %v652 = vadd.f32 %v649, 1.0
    %v653 = vrcp.pop %v650
    %v654 = vmul.f32 1.0, %v653
    %v655 = vrcp.pop %v651
    %v656 = vmul.f32 1.0, %v655
    %v657 = vrcp.pop %v652
    %v658 = vmul.f32 1.0, %v657
    %v659 = vtanh.pop %v640
    %v660 = vmul.f32 %v656, 0.0
    %v661 = vmul.f32 %v654, %v659
    %v662 = vadd.f32 %v660, %v661
    %v663 = vtanh.pop %v662
    %v664 = vmul.f32 %v658, %v663
    %665 = vst [vmem:[#allocation2] sm:$0xff] %v664
    %v666 = vpack.c.bf16 %v664, %v664
    %667 = vmatprep.subr.bf16.mxu0 %v492
    %668 = vmatpush1.bf16.msra.mxu0 %v491
    %669 = vmatprep.subr.bf16.mxu0 %v496
    %670 = vmatpush1.bf16.msra.mxu0 %v495
    %671 = vmatprep.subr.bf16.mxu0 %v500
    %672 = vmatpush1.bf16.msra.mxu0 %v499
    %673 = vmatprep.subr.bf16.mxu0 %v504
    %674 = vmatpush1.bf16.msra.mxu0 %v503
    %675 = vmatprep.subr.bf16.mxu0 %v508
    %676 = vmatpush1.bf16.msra.mxu0 %v507
    %677 = vmatprep.subr.bf16.mxu0 %v512
    %678 = vmatpush1.bf16.msra.mxu0 %v511
    %679 = vmatprep.subr.bf16.mxu0 %v516
    %680 = vmatpush1.bf16.msra.mxu0 %v515
    %681 = vmatprep.subr.bf16.mxu0 %v520
    %682 = vmatpush1.bf16.msra.mxu0 %v519
    %683 = vmatprep.subr.bf16.mxu0 0
    %684 = vmatpush1.bf16.msra.mxu0 0
    %685 = vmatprep.subr.bf16.mxu0 0
    %686 = vmatpush1.bf16.msra.mxu0 0
    %687 = vmatprep.subr.bf16.mxu0 0
    %688 = vmatpush1.bf16.msra.mxu0 0
    %689 = vmatprep.subr.bf16.mxu0 0
    %690 = vmatpush1.bf16.msra.mxu0 0
    %691 = vmatprep.subr.bf16.mxu0 0
    %692 = vmatpush1.bf16.msra.mxu0 0
    %693 = vmatprep.subr.bf16.mxu0 0
    %694 = vmatpush1.bf16.msra.mxu0 0
    %695 = vmatprep.subr.bf16.mxu0 0
    %696 = vmatpush1.bf16.msra.mxu0 0
    %697 = vmatprep.subr.bf16.mxu0 0
    %698 = vmatpush1.bf16.msra.mxu0 0
    %699 = vmatprep.mubr.bf16.mxu0 0
    %700 = vmatmul.mubr.bf16.gmra.mrb[0].mxu0 %v666
    %v701 = vpop.f32.mrb[0].mxu0
    %v702 = vadd.f32 0.0, %v701
    %v703 = vpop.f32.mrb[0].mxu0
    %v704 = vadd.f32 0.0, %v703
    %v705 = vpop.f32.mrb[0].mxu0
    %v706 = vpop.f32.mrb[0].mxu0
    %707 = vdwg.mxu0
    %708 = vmatprep.subr.bf16.mxu0 %v494
    %709 = vmatpush1.bf16.msra.mxu0 %v493
    %710 = vmatprep.subr.bf16.mxu0 %v498
    %711 = vmatpush1.bf16.msra.mxu0 %v497
    %712 = vmatprep.subr.bf16.mxu0 %v502
    %713 = vmatpush1.bf16.msra.mxu0 %v501
    %714 = vmatprep.subr.bf16.mxu0 %v506
    %715 = vmatpush1.bf16.msra.mxu0 %v505
    %716 = vmatprep.subr.bf16.mxu0 %v510
    %717 = vmatpush1.bf16.msra.mxu0 %v509
    %718 = vmatprep.subr.bf16.mxu0 %v514
    %719 = vmatpush1.bf16.msra.mxu0 %v513
    %720 = vmatprep.subr.bf16.mxu0 %v518
    %721 = vmatpush1.bf16.msra.mxu0 %v517
    %722 = vmatprep.subr.bf16.mxu0 %v522
    %723 = vmatpush1.bf16.msra.mxu0 %v521
    %724 = vmatprep.subr.bf16.mxu0 0
    %725 = vmatpush1.bf16.msra.mxu0 0
    %726 = vmatprep.subr.bf16.mxu0 0
    %727 = vmatpush1.bf16.msra.mxu0 0
    %728 = vmatprep.subr.bf16.mxu0 0
    %729 = vmatpush1.bf16.msra.mxu0 0
    %730 = vmatprep.subr.bf16.mxu0 0
    %731 = vmatpush1.bf16.msra.mxu0 0
    %732 = vmatprep.subr.bf16.mxu0 0
    %733 = vmatpush1.bf16.msra.mxu0 0
    %734 = vmatprep.subr.bf16.mxu0 0
    %735 = vmatpush1.bf16.msra.mxu0 0
    %736 = vmatprep.subr.bf16.mxu0 0
    %737 = vmatpush1.bf16.msra.mxu0 0
    %738 = vmatprep.subr.bf16.mxu0 0
    %739 = vmatpush1.bf16.msra.mxu0 0
    %740 = vmatprep.mubr.bf16.mxu0 0
    %741 = vmatmul.mubr.bf16.gmra.mrb[0].mxu0 %v666
    %v742 = vpop.f32.mrb[0].mxu0
    %v743 = vadd.f32 0.0, %v742
    %v744 = vpop.f32.mrb[0].mxu0
    %v745 = vadd.f32 0.0, %v744
    %v746 = vpop.f32.mrb[0].mxu0
    %v747 = vpop.f32.mrb[0].mxu0
    %748 = vdwg.mxu0
    %v749 = vadd.f32 %v316, %v702
    %v750 = vadd.f32 %v318, %v704
    %v751 = vadd.f32 %v357, %v743
    %v752 = vadd.f32 %v359, %v745
    %v753 = vxor.u32 %v749, 2147483648
    %v754 = vxor.u32 %v750, 2147483648
    %v755 = vxor.u32 %v751, 2147483648
    %v756 = vmul.f32 %v753, 1.442695
    %v757 = vpow.pop %v756
    %v758 = vmul.f32 %v754, 1.442695
    %v759 = vpow.pop %v758
    %v760 = vmul.f32 %v755, 1.442695
    %v761 = vpow.pop %v760
    %v762 = vadd.f32 %v757, 1.0
    %v763 = vadd.f32 %v759, 1.0
    %v764 = vadd.f32 %v761, 1.0
    %v765 = vrcp.pop %v762
    %v766 = vmul.f32 1.0, %v765
    %v767 = vrcp.pop %v763
    %v768 = vmul.f32 1.0, %v767
    %v769 = vrcp.pop %v764
    %v770 = vmul.f32 1.0, %v769
    %v771 = vtanh.pop %v752
    %v772 = vmul.f32 %v768, %v662
    %v773 = vmul.f32 %v766, %v771
    %v774 = vadd.f32 %v772, %v773
    %v775 = vtanh.pop %v774
    %v776 = vmul.f32 %v770, %v775
    %777 = vst [vmem:[#allocation2 + $0x8] sm:$0xff] %v776
    %v778 = vpack.c.bf16 %v776, %v776
    %779 = vmatprep.subr.bf16.mxu0 %v492
    %780 = vmatpush1.bf16.msra.mxu0 %v491
    %781 = vmatprep.subr.bf16.mxu0 %v496
    %782 = vmatpush1.bf16.msra.mxu0 %v495
    %783 = vmatprep.subr.bf16.mxu0 %v500
    %784 = vmatpush1.bf16.msra.mxu0 %v499
    %785 = vmatprep.subr.bf16.mxu0 %v504
    %786 = vmatpush1.bf16.msra.mxu0 %v503
    %787 = vmatprep.subr.bf16.mxu0 %v508
    %788 = vmatpush1.bf16.msra.mxu0 %v507
    %789 = vmatprep.subr.bf16.mxu0 %v512
    %790 = vmatpush1.bf16.msra.mxu0 %v511
    %791 = vmatprep.subr.bf16.mxu0 %v516
    %792 = vmatpush1.bf16.msra.mxu0 %v515
    %793 = vmatprep.subr.bf16.mxu0 %v520
    %794 = vmatpush1.bf16.msra.mxu0 %v519
    %795 = vmatprep.subr.bf16.mxu0 0
    %796 = vmatpush1.bf16.msra.mxu0 0
    %797 = vmatprep.subr.bf16.mxu0 0
    %798 = vmatpush1.bf16.msra.mxu0 0
    %799 = vmatprep.subr.bf16.mxu0 0
    %800 = vmatpush1.bf16.msra.mxu0 0
    %801 = vmatprep.subr.bf16.mxu0 0
    %802 = vmatpush1.bf16.msra.mxu0 0
    %803 = vmatprep.subr.bf16.mxu0 0
    %804 = vmatpush1.bf16.msra.mxu0 0
    %805 = vmatprep.subr.bf16.mxu0 0
    %806 = vmatpush1.bf16.msra.mxu0 0
    %807 = vmatprep.subr.bf16.mxu0 0
    %808 = vmatpush1.bf16.msra.mxu0 0
    %809 = vmatprep.subr.bf16.mxu0 0
    %810 = vmatpush1.bf16.msra.mxu0 0
    %811 = vmatprep.mubr.bf16.mxu0 0
    %812 = vmatmul.mubr.bf16.gmra.mrb[0].mxu0 %v778
    %v813 = vpop.f32.mrb[0].mxu0
    %v814 = vadd.f32 0.0, %v813
    %v815 = vpop.f32.mrb[0].mxu0
    %v816 = vadd.f32 0.0, %v815
    %v817 = vpop.f32.mrb[0].mxu0
    %v818 = vpop.f32.mrb[0].mxu0
    %819 = vdwg.mxu0
    %820 = vmatprep.subr.bf16.mxu0 %v494
    %821 = vmatpush1.bf16.msra.mxu0 %v493
    %822 = vmatprep.subr.bf16.mxu0 %v498
    %823 = vmatpush1.bf16.msra.mxu0 %v497
    %824 = vmatprep.subr.bf16.mxu0 %v502
    %825 = vmatpush1.bf16.msra.mxu0 %v501
    %826 = vmatprep.subr.bf16.mxu0 %v506
    %827 = vmatpush1.bf16.msra.mxu0 %v505
    %828 = vmatprep.subr.bf16.mxu0 %v510
    %829 = vmatpush1.bf16.msra.mxu0 %v509
    %830 = vmatprep.subr.bf16.mxu0 %v514
    %831 = vmatpush1.bf16.msra.mxu0 %v513
    %832 = vmatprep.subr.bf16.mxu0 %v518
    %833 = vmatpush1.bf16.msra.mxu0 %v517
    %834 = vmatprep.subr.bf16.mxu0 %v522
    %835 = vmatpush1.bf16.msra.mxu0 %v521
    %836 = vmatprep.subr.bf16.mxu0 0
    %837 = vmatpush1.bf16.msra.mxu0 0
    %838 = vmatprep.subr.bf16.mxu0 0
    %839 = vmatpush1.bf16.msra.mxu0 0
    %840 = vmatprep.subr.bf16.mxu0 0
    %841 = vmatpush1.bf16.msra.mxu0 0
    %842 = vmatprep.subr.bf16.mxu0 0
    %843 = vmatpush1.bf16.msra.mxu0 0
    %844 = vmatprep.subr.bf16.mxu0 0
    %845 = vmatpush1.bf16.msra.mxu0 0
    %846 = vmatprep.subr.bf16.mxu0 0
    %847 = vmatpush1.bf16.msra.mxu0 0
    %848 = vmatprep.subr.bf16.mxu0 0
    %849 = vmatpush1.bf16.msra.mxu0 0
    %850 = vmatprep.subr.bf16.mxu0 0
    %851 = vmatpush1.bf16.msra.mxu0 0
    %852 = vmatprep.mubr.bf16.mxu0 0
    %853 = vmatmul.mubr.bf16.gmra.mrb[0].mxu0 %v778
    %v854 = vpop.f32.mrb[0].mxu0
    %v855 = vadd.f32 0.0, %v854
    %v856 = vpop.f32.mrb[0].mxu0
    %v857 = vadd.f32 0.0, %v856
    %v858 = vpop.f32.mrb[0].mxu0
    %v859 = vpop.f32.mrb[0].mxu0
    %860 = vdwg.mxu0
    %v861 = vadd.f32 %v316, %v814
    %v862 = vadd.f32 %v318, %v816
    %v863 = vadd.f32 %v357, %v855
    %v864 = vadd.f32 %v359, %v857
    %v865 = vxor.u32 %v861, 2147483648
    %v866 = vxor.u32 %v862, 2147483648
    %v867 = vxor.u32 %v863, 2147483648
    %v868 = vmul.f32 %v865, 1.442695
    %v869 = vpow.pop %v868
    %v870 = vmul.f32 %v866, 1.442695
    %v871 = vpow.pop %v870
    %v872 = vmul.f32 %v867, 1.442695
    %v873 = vpow.pop %v872
    %v874 = vadd.f32 %v869, 1.0
    %v875 = vadd.f32 %v871, 1.0
    %v876 = vadd.f32 %v873, 1.0
    %v877 = vrcp.pop %v874
    %v878 = vmul.f32 1.0, %v877
    %v879 = vrcp.pop %v875
    %v880 = vmul.f32 1.0, %v879
    %v881 = vrcp.pop %v876
    %v882 = vmul.f32 1.0, %v881
    %v883 = vtanh.pop %v864
    %v884 = vmul.f32 %v880, %v774
    %v885 = vmul.f32 %v878, %v883
    %v886 = vadd.f32 %v884, %v885
    %v887 = vtanh.pop %v886
    %v888 = vmul.f32 %v882, %v887
    %889 = vst [vmem:[#allocation2 + $0x10] sm:$0xff] %v888
    %v890 = vpack.c.bf16 %v888, %v888
    %891 = vmatprep.subr.bf16.mxu0 %v492
    %892 = vmatpush1.bf16.msra.mxu0 %v491
    %893 = vmatprep.subr.bf16.mxu0 %v496
    %894 = vmatpush1.bf16.msra.mxu0 %v495
    %895 = vmatprep.subr.bf16.mxu0 %v500
    %896 = vmatpush1.bf16.msra.mxu0 %v499
    %897 = vmatprep.subr.bf16.mxu0 %v504
    %898 = vmatpush1.bf16.msra.mxu0 %v503
    %899 = vmatprep.subr.bf16.mxu0 %v508
    %900 = vmatpush1.bf16.msra.mxu0 %v507
    %901 = vmatprep.subr.bf16.mxu0 %v512
    %902 = vmatpush1.bf16.msra.mxu0 %v511
    %903 = vmatprep.subr.bf16.mxu0 %v516
    %904 = vmatpush1.bf16.msra.mxu0 %v515
    %905 = vmatprep.subr.bf16.mxu0 %v520
    %906 = vmatpush1.bf16.msra.mxu0 %v519
    %907 = vmatprep.subr.bf16.mxu0 0
    %908 = vmatpush1.bf16.msra.mxu0 0
    %909 = vmatprep.subr.bf16.mxu0 0
    %910 = vmatpush1.bf16.msra.mxu0 0
    %911 = vmatprep.subr.bf16.mxu0 0
    %912 = vmatpush1.bf16.msra.mxu0 0
    %913 = vmatprep.subr.bf16.mxu0 0
    %914 = vmatpush1.bf16.msra.mxu0 0
    %915 = vmatprep.subr.bf16.mxu0 0
    %916 = vmatpush1.bf16.msra.mxu0 0
    %917 = vmatprep.subr.bf16.mxu0 0
    %918 = vmatpush1.bf16.msra.mxu0 0
    %919 = vmatprep.subr.bf16.mxu0 0
    %920 = vmatpush1.bf16.msra.mxu0 0
    %921 = vmatprep.subr.bf16.mxu0 0
    %922 = vmatpush1.bf16.msra.mxu0 0
    %923 = vmatprep.mubr.bf16.mxu0 0
    %924 = vmatmul.mubr.bf16.gmra.mrb[0].mxu0 %v890
    %v925 = vpop.f32.mrb[0].mxu0
    %v926 = vadd.f32 0.0, %v925
    %v927 = vpop.f32.mrb[0].mxu0
    %v928 = vadd.f32 0.0, %v927
    %v929 = vpop.f32.mrb[0].mxu0
    %v930 = vpop.f32.mrb[0].mxu0
    %931 = vdwg.mxu0
    %932 = vmatprep.subr.bf16.mxu0 %v494
    %933 = vmatpush1.bf16.msra.mxu0 %v493
    %934 = vmatprep.subr.bf16.mxu0 %v498
    %935 = vmatpush1.bf16.msra.mxu0 %v497
    %936 = vmatprep.subr.bf16.mxu0 %v502
    %937 = vmatpush1.bf16.msra.mxu0 %v501
    %938 = vmatprep.subr.bf16.mxu0 %v506
    %939 = vmatpush1.bf16.msra.mxu0 %v505
    %940 = vmatprep.subr.bf16.mxu0 %v510
    %941 = vmatpush1.bf16.msra.mxu0 %v509
    %942 = vmatprep.subr.bf16.mxu0 %v514
    %943 = vmatpush1.bf16.msra.mxu0 %v513
    %944 = vmatprep.subr.bf16.mxu0 %v518
    %945 = vmatpush1.bf16.msra.mxu0 %v517
    %946 = vmatprep.subr.bf16.mxu0 %v522
    %947 = vmatpush1.bf16.msra.mxu0 %v521
    %948 = vmatprep.subr.bf16.mxu0 0
    %949 = vmatpush1.bf16.msra.mxu0 0
    %950 = vmatprep.subr.bf16.mxu0 0
    %951 = vmatpush1.bf16.msra.mxu0 0
    %952 = vmatprep.subr.bf16.mxu0 0
    %953 = vmatpush1.bf16.msra.mxu0 0
    %954 = vmatprep.subr.bf16.mxu0 0
    %955 = vmatpush1.bf16.msra.mxu0 0
    %956 = vmatprep.subr.bf16.mxu0 0
    %957 = vmatpush1.bf16.msra.mxu0 0
    %958 = vmatprep.subr.bf16.mxu0 0
    %959 = vmatpush1.bf16.msra.mxu0 0
    %960 = vmatprep.subr.bf16.mxu0 0
    %961 = vmatpush1.bf16.msra.mxu0 0
    %962 = vmatprep.subr.bf16.mxu0 0
    %963 = vmatpush1.bf16.msra.mxu0 0
    %964 = vmatprep.mubr.bf16.mxu0 0
    %965 = vmatmul.mubr.bf16.gmra.mrb[0].mxu0 %v890
    %v966 = vpop.f32.mrb[0].mxu0
    %v967 = vadd.f32 0.0, %v966
    %v968 = vpop.f32.mrb[0].mxu0
    %v969 = vadd.f32 0.0, %v968
    %v970 = vpop.f32.mrb[0].mxu0
    %v971 = vpop.f32.mrb[0].mxu0
    %972 = vdwg.mxu0
    %v973 = vadd.f32 %v316, %v926
    %v974 = vadd.f32 %v318, %v928
    %v975 = vadd.f32 %v357, %v967
    %v976 = vadd.f32 %v359, %v969
    %v977 = vxor.u32 %v973, 2147483648
    %v978 = vxor.u32 %v974, 2147483648
    %v979 = vxor.u32 %v975, 2147483648
    %v980 = vmul.f32 %v977, 1.442695
    %v981 = vpow.pop %v980
    %v982 = vmul.f32 %v978, 1.442695
    %v983 = vpow.pop %v982
    %v984 = vmul.f32 %v979, 1.442695
    %v985 = vpow.pop %v984
    %v986 = vadd.f32 %v981, 1.0
    %v987 = vadd.f32 %v983, 1.0
    %v988 = vadd.f32 %v985, 1.0
    %v989 = vrcp.pop %v986
    %v990 = vmul.f32 1.0, %v989
    %v991 = vrcp.pop %v987
    %v992 = vmul.f32 1.0, %v991
    %v993 = vrcp.pop %v988
    %v994 = vmul.f32 1.0, %v993
    %v995 = vtanh.pop %v976
    %v996 = vmul.f32 %v992, %v886
    %v997 = vmul.f32 %v990, %v995
    %v998 = vadd.f32 %v996, %v997
    %v999 = vtanh.pop %v998
    %v1000 = vmul.f32 %v994, %v999
    %1001 = vst [vmem:[#allocation2 + $0x18] sm:$0xff] %v1000
    %v1002 = vpack.c.bf16 %v1000, %v1000
    %1003 = vmatprep.subr.bf16.mxu0 %v492
    %1004 = vmatpush1.bf16.msra.mxu0 %v491
    %1005 = vmatprep.subr.bf16.mxu0 %v496
    %1006 = vmatpush1.bf16.msra.mxu0 %v495
    %1007 = vmatprep.subr.bf16.mxu0 %v500
    %1008 = vmatpush1.bf16.msra.mxu0 %v499
    %1009 = vmatprep.subr.bf16.mxu0 %v504
    %1010 = vmatpush1.bf16.msra.mxu0 %v503
    %1011 = vmatprep.subr.bf16.mxu0 %v508
    %1012 = vmatpush1.bf16.msra.mxu0 %v507
    %1013 = vmatprep.subr.bf16.mxu0 %v512
    %1014 = vmatpush1.bf16.msra.mxu0 %v511
    %1015 = vmatprep.subr.bf16.mxu0 %v516
    %1016 = vmatpush1.bf16.msra.mxu0 %v515
    %1017 = vmatprep.subr.bf16.mxu0 %v520
    %1018 = vmatpush1.bf16.msra.mxu0 %v519
    %1019 = vmatprep.subr.bf16.mxu0 0
    %1020 = vmatpush1.bf16.msra.mxu0 0
    %1021 = vmatprep.subr.bf16.mxu0 0
    %1022 = vmatpush1.bf16.msra.mxu0 0
    %1023 = vmatprep.subr.bf16.mxu0 0
    %1024 = vmatpush1.bf16.msra.mxu0 0
    %1025 = vmatprep.subr.bf16.mxu0 0
    %1026 = vmatpush1.bf16.msra.mxu0 0
    %1027 = vmatprep.subr.bf16.mxu0 0
    %1028 = vmatpush1.bf16.msra.mxu0 0
    %1029 = vmatprep.subr.bf16.mxu0 0
    %1030 = vmatpush1.bf16.msra.mxu0 0
    %1031 = vmatprep.subr.bf16.mxu0 0
    %1032 = vmatpush1.bf16.msra.mxu0 0
    %1033 = vmatprep.subr.bf16.mxu0 0
    %1034 = vmatpush1.bf16.msra.mxu0 0
    %1035 = vmatprep.mubr.bf16.mxu0 0
    %1036 = vmatmul.mubr.bf16.gmra.mrb[0].mxu0 %v1002
    %v1037 = vpop.f32.mrb[0].mxu0
    %v1038 = vadd.f32 0.0, %v1037
    %v1039 = vpop.f32.mrb[0].mxu0
    %v1040 = vadd.f32 0.0, %v1039
    %v1041 = vpop.f32.mrb[0].mxu0
    %v1042 = vpop.f32.mrb[0].mxu0
    %1043 = vdwg.mxu0
    %1044 = vmatprep.subr.bf16.mxu0 %v494
    %1045 = vmatpush1.bf16.msra.mxu0 %v493
    %1046 = vmatprep.subr.bf16.mxu0 %v498
    %1047 = vmatpush1.bf16.msra.mxu0 %v497
    %1048 = vmatprep.subr.bf16.mxu0 %v502
    %1049 = vmatpush1.bf16.msra.mxu0 %v501
    %1050 = vmatprep.subr.bf16.mxu0 %v506
    %1051 = vmatpush1.bf16.msra.mxu0 %v505
    %1052 = vmatprep.subr.bf16.mxu0 %v510
    %1053 = vmatpush1.bf16.msra.mxu0 %v509
    %1054 = vmatprep.subr.bf16.mxu0 %v514
    %1055 = vmatpush1.bf16.msra.mxu0 %v513
    %1056 = vmatprep.subr.bf16.mxu0 %v518
    %1057 = vmatpush1.bf16.msra.mxu0 %v517
    %1058 = vmatprep.subr.bf16.mxu0 %v522
    %1059 = vmatpush1.bf16.msra.mxu0 %v521
    %1060 = vmatprep.subr.bf16.mxu0 0
    %1061 = vmatpush1.bf16.msra.mxu0 0
    %1062 = vmatprep.subr.bf16.mxu0 0
    %1063 = vmatpush1.bf16.msra.mxu0 0
    %1064 = vmatprep.subr.bf16.mxu0 0
    %1065 = vmatpush1.bf16.msra.mxu0 0
    %1066 = vmatprep.subr.bf16.mxu0 0
    %1067 = vmatpush1.bf16.msra.mxu0 0
    %1068 = vmatprep.subr.bf16.mxu0 0
    %1069 = vmatpush1.bf16.msra.mxu0 0
    %1070 = vmatprep.subr.bf16.mxu0 0
    %1071 = vmatpush1.bf16.msra.mxu0 0
    %1072 = vmatprep.subr.bf16.mxu0 0
    %1073 = vmatpush1.bf16.msra.mxu0 0
    %1074 = vmatprep.subr.bf16.mxu0 0
    %1075 = vmatpush1.bf16.msra.mxu0 0
    %1076 = vmatprep.mubr.bf16.mxu0 0
    %1077 = vmatmul.mubr.bf16.gmra.mrb[0].mxu0 %v1002
    %v1078 = vpop.f32.mrb[0].mxu0
    %v1079 = vadd.f32 0.0, %v1078
    %v1080 = vpop.f32.mrb[0].mxu0
    %v1081 = vadd.f32 0.0, %v1080
    %v1082 = vpop.f32.mrb[0].mxu0
    %v1083 = vpop.f32.mrb[0].mxu0
    %1084 = vdwg.mxu0
    %v1085 = vadd.f32 %v316, %v1038
    %v1086 = vadd.f32 %v318, %v1040
    %v1087 = vadd.f32 %v357, %v1079
    %v1088 = vadd.f32 %v359, %v1081
    %v1089 = vxor.u32 %v1085, 2147483648
    %v1090 = vxor.u32 %v1086, 2147483648
    %v1091 = vxor.u32 %v1087, 2147483648
    %v1092 = vmul.f32 %v1089, 1.442695
    %v1093 = vpow.pop %v1092
    %v1094 = vmul.f32 %v1090, 1.442695
    %v1095 = vpow.pop %v1094
    %v1096 = vmul.f32 %v1091, 1.442695
    %v1097 = vpow.pop %v1096
    %v1098 = vadd.f32 %v1093, 1.0
    %v1099 = vadd.f32 %v1095, 1.0
    %v1100 = vadd.f32 %v1097, 1.0
    %v1101 = vrcp.pop %v1098
    %v1102 = vmul.f32 1.0, %v1101
    %v1103 = vrcp.pop %v1099
    %v1104 = vmul.f32 1.0, %v1103
    %v1105 = vrcp.pop %v1100
    %v1106 = vmul.f32 1.0, %v1105
    %v1107 = vtanh.pop %v1088
    %v1108 = vmul.f32 %v1104, %v998
    %v1109 = vmul.f32 %v1102, %v1107
    %v1110 = vadd.f32 %v1108, %v1109
    %v1111 = vtanh.pop %v1110
    %v1112 = vmul.f32 %v1106, %v1111
    %1113 = vst [vmem:[#allocation2 + $0x20] sm:$0xff] %v1112
    %v1114 = vpack.c.bf16 %v1112, %v1112
    %1115 = vmatprep.subr.bf16.mxu0 %v492
    %1116 = vmatpush1.bf16.msra.mxu0 %v491
    %1117 = vmatprep.subr.bf16.mxu0 %v496
    %1118 = vmatpush1.bf16.msra.mxu0 %v495
    %1119 = vmatprep.subr.bf16.mxu0 %v500
    %1120 = vmatpush1.bf16.msra.mxu0 %v499
    %1121 = vmatprep.subr.bf16.mxu0 %v504
    %1122 = vmatpush1.bf16.msra.mxu0 %v503
    %1123 = vmatprep.subr.bf16.mxu0 %v508
    %1124 = vmatpush1.bf16.msra.mxu0 %v507
    %1125 = vmatprep.subr.bf16.mxu0 %v512
    %1126 = vmatpush1.bf16.msra.mxu0 %v511
    %1127 = vmatprep.subr.bf16.mxu0 %v516
    %1128 = vmatpush1.bf16.msra.mxu0 %v515
    %1129 = vmatprep.subr.bf16.mxu0 %v520
    %1130 = vmatpush1.bf16.msra.mxu0 %v519
    %1131 = vmatprep.subr.bf16.mxu0 0
    %1132 = vmatpush1.bf16.msra.mxu0 0
    %1133 = vmatprep.subr.bf16.mxu0 0
    %1134 = vmatpush1.bf16.msra.mxu0 0
    %1135 = vmatprep.subr.bf16.mxu0 0
    %1136 = vmatpush1.bf16.msra.mxu0 0
    %1137 = vmatprep.subr.bf16.mxu0 0
    %1138 = vmatpush1.bf16.msra.mxu0 0
    %1139 = vmatprep.subr.bf16.mxu0 0
    %1140 = vmatpush1.bf16.msra.mxu0 0
    %1141 = vmatprep.subr.bf16.mxu0 0
    %1142 = vmatpush1.bf16.msra.mxu0 0
    %1143 = vmatprep.subr.bf16.mxu0 0
    %1144 = vmatpush1.bf16.msra.mxu0 0
    %1145 = vmatprep.subr.bf16.mxu0 0
    %1146 = vmatpush1.bf16.msra.mxu0 0
    %1147 = vmatprep.mubr.bf16.mxu0 0
    %1148 = vmatmul.mubr.bf16.gmra.mrb[0].mxu0 %v1114
    %v1149 = vpop.f32.mrb[0].mxu0
    %v1150 = vadd.f32 0.0, %v1149
    %v1151 = vpop.f32.mrb[0].mxu0
    %v1152 = vadd.f32 0.0, %v1151
    %v1153 = vpop.f32.mrb[0].mxu0
    %v1154 = vpop.f32.mrb[0].mxu0
    %1155 = vdwg.mxu0
    %1156 = vmatprep.subr.bf16.mxu0 %v494
    %1157 = vmatpush1.bf16.msra.mxu0 %v493
    %1158 = vmatprep.subr.bf16.mxu0 %v498
    %1159 = vmatpush1.bf16.msra.mxu0 %v497
    %1160 = vmatprep.subr.bf16.mxu0 %v502
    %1161 = vmatpush1.bf16.msra.mxu0 %v501
    %1162 = vmatprep.subr.bf16.mxu0 %v506
    %1163 = vmatpush1.bf16.msra.mxu0 %v505
    %1164 = vmatprep.subr.bf16.mxu0 %v510
    %1165 = vmatpush1.bf16.msra.mxu0 %v509
    %1166 = vmatprep.subr.bf16.mxu0 %v514
    %1167 = vmatpush1.bf16.msra.mxu0 %v513
    %1168 = vmatprep.subr.bf16.mxu0 %v518
    %1169 = vmatpush1.bf16.msra.mxu0 %v517
    %1170 = vmatprep.subr.bf16.mxu0 %v522
    %1171 = vmatpush1.bf16.msra.mxu0 %v521
    %1172 = vmatprep.subr.bf16.mxu0 0
    %1173 = vmatpush1.bf16.msra.mxu0 0
    %1174 = vmatprep.subr.bf16.mxu0 0
    %1175 = vmatpush1.bf16.msra.mxu0 0
    %1176 = vmatprep.subr.bf16.mxu0 0
    %1177 = vmatpush1.bf16.msra.mxu0 0
    %1178 = vmatprep.subr.bf16.mxu0 0
    %1179 = vmatpush1.bf16.msra.mxu0 0
    %1180 = vmatprep.subr.bf16.mxu0 0
    %1181 = vmatpush1.bf16.msra.mxu0 0
    %1182 = vmatprep.subr.bf16.mxu0 0
    %1183 = vmatpush1.bf16.msra.mxu0 0
    %1184 = vmatprep.subr.bf16.mxu0 0
    %1185 = vmatpush1.bf16.msra.mxu0 0
    %1186 = vmatprep.subr.bf16.mxu0 0
    %1187 = vmatpush1.bf16.msra.mxu0 0
    %1188 = vmatprep.mubr.bf16.mxu0 0
    %1189 = vmatmul.mubr.bf16.gmra.mrb[0].mxu0 %v1114
    %v1190 = vpop.f32.mrb[0].mxu0
    %v1191 = vadd.f32 0.0, %v1190
    %v1192 = vpop.f32.mrb[0].mxu0
    %v1193 = vadd.f32 0.0, %v1192
    %v1194 = vpop.f32.mrb[0].mxu0
    %v1195 = vpop.f32.mrb[0].mxu0
    %1196 = vdwg.mxu0
    %v1197 = vadd.f32 %v316, %v1150
    %v1198 = vadd.f32 %v318, %v1152
    %v1199 = vadd.f32 %v357, %v1191
    %v1200 = vadd.f32 %v359, %v1193
    %v1201 = vxor.u32 %v1197, 2147483648
    %v1202 = vxor.u32 %v1198, 2147483648
    %v1203 = vxor.u32 %v1199, 2147483648
    %v1204 = vmul.f32 %v1201, 1.442695
    %v1205 = vpow.pop %v1204
    %v1206 = vmul.f32 %v1202, 1.442695
    %v1207 = vpow.pop %v1206
    %v1208 = vmul.f32 %v1203, 1.442695
    %v1209 = vpow.pop %v1208
    %v1210 = vadd.f32 %v1205, 1.0
    %v1211 = vadd.f32 %v1207, 1.0
    %v1212 = vadd.f32 %v1209, 1.0
    %v1213 = vrcp.pop %v1210
    %v1214 = vmul.f32 1.0, %v1213
    %v1215 = vrcp.pop %v1211
    %v1216 = vmul.f32 1.0, %v1215
    %v1217 = vrcp.pop %v1212
    %v1218 = vmul.f32 1.0, %v1217
    %v1219 = vtanh.pop %v1200
    %v1220 = vmul.f32 %v1216, %v1110
    %v1221 = vmul.f32 %v1214, %v1219
    %v1222 = vadd.f32 %v1220, %v1221
    %v1223 = vtanh.pop %v1222
    %v1224 = vmul.f32 %v1218, %v1223
    %1225 = vst [vmem:[#allocation2 + $0x28] sm:$0xff] %v1224
    %v1226 = vpack.c.bf16 %v1224, %v1224
    %1227 = vmatprep.subr.bf16.mxu0 %v492
    %1228 = vmatpush1.bf16.msra.mxu0 %v491
    %1229 = vmatprep.subr.bf16.mxu0 %v496
    %1230 = vmatpush1.bf16.msra.mxu0 %v495
    %1231 = vmatprep.subr.bf16.mxu0 %v500
    %1232 = vmatpush1.bf16.msra.mxu0 %v499
    %1233 = vmatprep.subr.bf16.mxu0 %v504
    %1234 = vmatpush1.bf16.msra.mxu0 %v503
    %1235 = vmatprep.subr.bf16.mxu0 %v508
    %1236 = vmatpush1.bf16.msra.mxu0 %v507
    %1237 = vmatprep.subr.bf16.mxu0 %v512
    %1238 = vmatpush1.bf16.msra.mxu0 %v511
    %1239 = vmatprep.subr.bf16.mxu0 %v516
    %1240 = vmatpush1.bf16.msra.mxu0 %v515
    %1241 = vmatprep.subr.bf16.mxu0 %v520
    %1242 = vmatpush1.bf16.msra.mxu0 %v519
    %1243 = vmatprep.subr.bf16.mxu0 0
    %1244 = vmatpush1.bf16.msra.mxu0 0
    %1245 = vmatprep.subr.bf16.mxu0 0
    %1246 = vmatpush1.bf16.msra.mxu0 0
    %1247 = vmatprep.subr.bf16.mxu0 0
    %1248 = vmatpush1.bf16.msra.mxu0 0
    %1249 = vmatprep.subr.bf16.mxu0 0
    %1250 = vmatpush1.bf16.msra.mxu0 0
    %1251 = vmatprep.subr.bf16.mxu0 0
    %1252 = vmatpush1.bf16.msra.mxu0 0
    %1253 = vmatprep.subr.bf16.mxu0 0
    %1254 = vmatpush1.bf16.msra.mxu0 0
    %1255 = vmatprep.subr.bf16.mxu0 0
    %1256 = vmatpush1.bf16.msra.mxu0 0
    %1257 = vmatprep.subr.bf16.mxu0 0
    %1258 = vmatpush1.bf16.msra.mxu0 0
    %1259 = vmatprep.mubr.bf16.mxu0 0
    %1260 = vmatmul.mubr.bf16.gmra.mrb[0].mxu0 %v1226
    %v1261 = vpop.f32.mrb[0].mxu0
    %v1262 = vadd.f32 0.0, %v1261
    %v1263 = vpop.f32.mrb[0].mxu0
    %v1264 = vadd.f32 0.0, %v1263
    %v1265 = vpop.f32.mrb[0].mxu0
    %v1266 = vpop.f32.mrb[0].mxu0
    %1267 = vdwg.mxu0
    %1268 = vmatprep.subr.bf16.mxu0 %v494
    %1269 = vmatpush1.bf16.msra.mxu0 %v493
    %1270 = vmatprep.subr.bf16.mxu0 %v498
    %1271 = vmatpush1.bf16.msra.mxu0 %v497
    %1272 = vmatprep.subr.bf16.mxu0 %v502
    %1273 = vmatpush1.bf16.msra.mxu0 %v501
    %1274 = vmatprep.subr.bf16.mxu0 %v506
    %1275 = vmatpush1.bf16.msra.mxu0 %v505
    %1276 = vmatprep.subr.bf16.mxu0 %v510
    %1277 = vmatpush1.bf16.msra.mxu0 %v509
    %1278 = vmatprep.subr.bf16.mxu0 %v514
    %1279 = vmatpush1.bf16.msra.mxu0 %v513
    %1280 = vmatprep.subr.bf16.mxu0 %v518
    %1281 = vmatpush1.bf16.msra.mxu0 %v517
    %1282 = vmatprep.subr.bf16.mxu0 %v522
    %1283 = vmatpush1.bf16.msra.mxu0 %v521
    %1284 = vmatprep.subr.bf16.mxu0 0
    %1285 = vmatpush1.bf16.msra.mxu0 0
    %1286 = vmatprep.subr.bf16.mxu0 0
    %1287 = vmatpush1.bf16.msra.mxu0 0
    %1288 = vmatprep.subr.bf16.mxu0 0
    %1289 = vmatpush1.bf16.msra.mxu0 0
    %1290 = vmatprep.subr.bf16.mxu0 0
    %1291 = vmatpush1.bf16.msra.mxu0 0
    %1292 = vmatprep.subr.bf16.mxu0 0
    %1293 = vmatpush1.bf16.msra.mxu0 0
    %1294 = vmatprep.subr.bf16.mxu0 0
    %1295 = vmatpush1.bf16.msra.mxu0 0
    %1296 = vmatprep.subr.bf16.mxu0 0
    %1297 = vmatpush1.bf16.msra.mxu0 0
    %1298 = vmatprep.subr.bf16.mxu0 0
    %1299 = vmatpush1.bf16.msra.mxu0 0
    %1300 = vmatprep.mubr.bf16.mxu0 0
    %1301 = vmatmul.mubr.bf16.gmra.mrb[0].mxu0 %v1226
    %v1302 = vpop.f32.mrb[0].mxu0
    %v1303 = vadd.f32 0.0, %v1302
    %v1304 = vpop.f32.mrb[0].mxu0
    %v1305 = vadd.f32 0.0, %v1304
    %v1306 = vpop.f32.mrb[0].mxu0
    %v1307 = vpop.f32.mrb[0].mxu0
    %1308 = vdwg.mxu0
    %v1309 = vadd.f32 %v316, %v1262
    %v1310 = vadd.f32 %v318, %v1264
    %v1311 = vadd.f32 %v357, %v1303
    %v1312 = vadd.f32 %v359, %v1305
    %v1313 = vxor.u32 %v1309, 2147483648
    %v1314 = vxor.u32 %v1310, 2147483648
    %v1315 = vxor.u32 %v1311, 2147483648
    %v1316 = vmul.f32 %v1313, 1.442695
    %v1317 = vpow.pop %v1316
    %v1318 = vmul.f32 %v1314, 1.442695
    %v1319 = vpow.pop %v1318
    %v1320 = vmul.f32 %v1315, 1.442695
    %v1321 = vpow.pop %v1320
    %v1322 = vadd.f32 %v1317, 1.0
    %v1323 = vadd.f32 %v1319, 1.0
    %v1324 = vadd.f32 %v1321, 1.0
    %v1325 = vrcp.pop %v1322
    %v1326 = vmul.f32 1.0, %v1325
    %v1327 = vrcp.pop %v1323
    %v1328 = vmul.f32 1.0, %v1327
    %v1329 = vrcp.pop %v1324
    %v1330 = vmul.f32 1.0, %v1329
    %v1331 = vtanh.pop %v1312
    %v1332 = vmul.f32 %v1328, %v1222
    %v1333 = vmul.f32 %v1326, %v1331
    %v1334 = vadd.f32 %v1332, %v1333
    %v1335 = vtanh.pop %v1334
    %v1336 = vmul.f32 %v1330, %v1335
    %1337 = vst [vmem:[#allocation2 + $0x30] sm:$0xff] %v1336
    %v1338 = vpack.c.bf16 %v1336, %v1336
    %1339 = vmatprep.subr.bf16.mxu0 %v492
    %1340 = vmatpush1.bf16.msra.mxu0 %v491
    %1341 = vmatprep.subr.bf16.mxu0 %v496
    %1342 = vmatpush1.bf16.msra.mxu0 %v495
    %1343 = vmatprep.subr.bf16.mxu0 %v500
    %1344 = vmatpush1.bf16.msra.mxu0 %v499
    %1345 = vmatprep.subr.bf16.mxu0 %v504
    %1346 = vmatpush1.bf16.msra.mxu0 %v503
    %1347 = vmatprep.subr.bf16.mxu0 %v508
    %1348 = vmatpush1.bf16.msra.mxu0 %v507
    %1349 = vmatprep.subr.bf16.mxu0 %v512
    %1350 = vmatpush1.bf16.msra.mxu0 %v511
    %1351 = vmatprep.subr.bf16.mxu0 %v516
    %1352 = vmatpush1.bf16.msra.mxu0 %v515
    %1353 = vmatprep.subr.bf16.mxu0 %v520
    %1354 = vmatpush1.bf16.msra.mxu0 %v519
    %1355 = vmatprep.subr.bf16.mxu0 0
    %1356 = vmatpush1.bf16.msra.mxu0 0
    %1357 = vmatprep.subr.bf16.mxu0 0
    %1358 = vmatpush1.bf16.msra.mxu0 0
    %1359 = vmatprep.subr.bf16.mxu0 0
    %1360 = vmatpush1.bf16.msra.mxu0 0
    %1361 = vmatprep.subr.bf16.mxu0 0
    %1362 = vmatpush1.bf16.msra.mxu0 0
    %1363 = vmatprep.subr.bf16.mxu0 0
    %1364 = vmatpush1.bf16.msra.mxu0 0
    %1365 = vmatprep.subr.bf16.mxu0 0
    %1366 = vmatpush1.bf16.msra.mxu0 0
    %1367 = vmatprep.subr.bf16.mxu0 0
    %1368 = vmatpush1.bf16.msra.mxu0 0
    %1369 = vmatprep.subr.bf16.mxu0 0
    %1370 = vmatpush1.bf16.msra.mxu0 0
    %1371 = vmatprep.mubr.bf16.mxu0 0
    %1372 = vmatmul.mubr.bf16.gmra.mrb[0].mxu0 %v1338
    %v1373 = vpop.f32.mrb[0].mxu0
    %v1374 = vadd.f32 0.0, %v1373
    %v1375 = vpop.f32.mrb[0].mxu0
    %v1376 = vadd.f32 0.0, %v1375
    %v1377 = vpop.f32.mrb[0].mxu0
    %v1378 = vpop.f32.mrb[0].mxu0
    %1379 = vdwg.mxu0
    %1380 = vmatprep.subr.bf16.mxu0 %v494
    %1381 = vmatpush1.bf16.msra.mxu0 %v493
    %1382 = vmatprep.subr.bf16.mxu0 %v498
    %1383 = vmatpush1.bf16.msra.mxu0 %v497
    %1384 = vmatprep.subr.bf16.mxu0 %v502
    %1385 = vmatpush1.bf16.msra.mxu0 %v501
    %1386 = vmatprep.subr.bf16.mxu0 %v506
    %1387 = vmatpush1.bf16.msra.mxu0 %v505
    %1388 = vmatprep.subr.bf16.mxu0 %v510
    %1389 = vmatpush1.bf16.msra.mxu0 %v509
    %1390 = vmatprep.subr.bf16.mxu0 %v514
    %1391 = vmatpush1.bf16.msra.mxu0 %v513
    %1392 = vmatprep.subr.bf16.mxu0 %v518
    %1393 = vmatpush1.bf16.msra.mxu0 %v517
    %1394 = vmatprep.subr.bf16.mxu0 %v522
    %1395 = vmatpush1.bf16.msra.mxu0 %v521
    %1396 = vmatprep.subr.bf16.mxu0 0
    %1397 = vmatpush1.bf16.msra.mxu0 0
    %1398 = vmatprep.subr.bf16.mxu0 0
    %1399 = vmatpush1.bf16.msra.mxu0 0
    %1400 = vmatprep.subr.bf16.mxu0 0
    %1401 = vmatpush1.bf16.msra.mxu0 0
    %1402 = vmatprep.subr.bf16.mxu0 0
    %1403 = vmatpush1.bf16.msra.mxu0 0
    %1404 = vmatprep.subr.bf16.mxu0 0
    %1405 = vmatpush1.bf16.msra.mxu0 0
    %1406 = vmatprep.subr.bf16.mxu0 0
    %1407 = vmatpush1.bf16.msra.mxu0 0
    %1408 = vmatprep.subr.bf16.mxu0 0
    %1409 = vmatpush1.bf16.msra.mxu0 0
    %1410 = vmatprep.subr.bf16.mxu0 0
    %1411 = vmatpush1.bf16.msra.mxu0 0
    %1412 = vmatprep.mubr.bf16.mxu0 0
    %1413 = vmatmul.mubr.bf16.gmra.mrb[0].mxu0 %v1338
    %v1414 = vpop.f32.mrb[0].mxu0
    %v1415 = vadd.f32 0.0, %v1414
    %v1416 = vpop.f32.mrb[0].mxu0
    %v1417 = vadd.f32 0.0, %v1416
    %v1418 = vpop.f32.mrb[0].mxu0
    %v1419 = vpop.f32.mrb[0].mxu0
    %1420 = vdwg.mxu0
    %v1421 = vadd.f32 %v316, %v1374
    %v1422 = vadd.f32 %v318, %v1376
    %v1423 = vadd.f32 %v357, %v1415
    %v1424 = vadd.f32 %v359, %v1417
    %v1425 = vxor.u32 %v1421, 2147483648
    %v1426 = vxor.u32 %v1422, 2147483648
    %v1427 = vxor.u32 %v1423, 2147483648
    %v1428 = vmul.f32 %v1425, 1.442695
    %v1429 = vpow.pop %v1428
    %v1430 = vmul.f32 %v1426, 1.442695
    %v1431 = vpow.pop %v1430
    %v1432 = vmul.f32 %v1427, 1.442695
    %v1433 = vpow.pop %v1432
    %v1434 = vadd.f32 %v1429, 1.0
    %v1435 = vadd.f32 %v1431, 1.0
    %v1436 = vadd.f32 %v1433, 1.0
    %v1437 = vrcp.pop %v1434
    %v1438 = vmul.f32 1.0, %v1437
    %v1439 = vrcp.pop %v1435
    %v1440 = vmul.f32 1.0, %v1439
    %v1441 = vrcp.pop %v1436
    %v1442 = vmul.f32 1.0, %v1441
    %v1443 = vtanh.pop %v1424
    %v1444 = vmul.f32 %v1440, %v1334
    %v1445 = vmul.f32 %v1438, %v1443
    %v1446 = vadd.f32 %v1444, %v1445
    %v1447 = vtanh.pop %v1446
    %v1448 = vmul.f32 %v1442, %v1447
    %1449 = vst [vmem:[#allocation2 + $0x38] sm:$0xff] %v1448
    %v1450 = vld [vmem:[#allocation2] sm:$0xff]
    %v1451 = vld [vmem:[#allocation2 + $0x8] sm:$0xff]
    %v1452 = vld [vmem:[#allocation2 + $0x10] sm:$0xff]
    %v1453 = vld [vmem:[#allocation2 + $0x18] sm:$0xff]
    %v1454 = vld [vmem:[#allocation2 + $0x20] sm:$0xff]
    %v1455 = vld [vmem:[#allocation2 + $0x28] sm:$0xff]
    %v1456 = vld [vmem:[#allocation2 + $0x30] sm:$0xff]
    %v1457 = vld [vmem:[#allocation2 + $0x38] sm:$0xff]
    %v1458 = vpack.c.bf16 %v1451, %v1450
    %v1459 = vpack.c.bf16 %v1453, %v1452
    %v1460 = vpack.c.bf16 %v1455, %v1454
    %v1461 = vpack.c.bf16 %v1457, %v1456
    %v1462 = vld [vmem:[#allocation7] sm:$0xf]
    %v1463 = vld [vmem:[#allocation7 + $0x4] sm:$0xf]
    %v1464 = vld [vmem:[#allocation7 + $0x8] sm:$0xf]
    %v1465 = vld [vmem:[#allocation7 + $0xc] sm:$0xf]
    %v1466 = vld [vmem:[#allocation7 + $0x10] sm:$0xf]
    %v1467 = vld [vmem:[#allocation7 + $0x14] sm:$0xf]
    %v1468 = vld [vmem:[#allocation7 + $0x18] sm:$0xf]
    %v1469 = vld [vmem:[#allocation7 + $0x1c] sm:$0xf]
    %v1470 = vld [vmem:[#allocation7 + $0x20] sm:$0xf]
    %v1471 = vld [vmem:[#allocation7 + $0x24] sm:$0xf]
    %v1472 = vld [vmem:[#allocation7 + $0x28] sm:$0xf]
    %v1473 = vld [vmem:[#allocation7 + $0x2c] sm:$0xf]
    %v1474 = vld [vmem:[#allocation7 + $0x30] sm:$0xf]
    %v1475 = vld [vmem:[#allocation7 + $0x34] sm:$0xf]
    %v1476 = vld [vmem:[#allocation7 + $0x38] sm:$0xf]
    %v1477 = vld [vmem:[#allocation7 + $0x3c] sm:$0xf]
    %v1478 = vld [vmem:[%s5] sm:$0x1]
    %v1480 = vlaneseq
    %v1481 = vshrl.u32 %v1480, 7
    %v1482 = vsub.s32 0, %v1481
    %v1483 = vrot.slane %v1478, %v1482
    %v1501 = vunpack.c.l.b16 %v1462
    %v1502 = vunpack.c.l.b16 %v1463
    %v1503 = vunpack.c.l.b16 %v1464
    %v1504 = vunpack.c.l.b16 %v1465
    %v1505 = vunpack.c.l.b16 %v1466
    %v1506 = vunpack.c.l.b16 %v1467
    %v1507 = vunpack.c.l.b16 %v1468
    %v1508 = vunpack.c.l.b16 %v1469
    %v1509 = vunpack.c.l.b16 %v1470
    %v1510 = vunpack.c.l.b16 %v1471
    %v1511 = vunpack.c.l.b16 %v1472
    %v1512 = vunpack.c.l.b16 %v1473
    %v1513 = vunpack.c.l.b16 %v1474
    %v1514 = vunpack.c.l.b16 %v1475
    %v1515 = vunpack.c.l.b16 %v1476
    %v1516 = vunpack.c.l.b16 %v1477
    %v1517 = vpack.c.b16 %v1502, %v1501
    %v1518 = vpack.c.b16 %v1504, %v1503
    %v1519 = vpack.c.b16 %v1506, %v1505
    %v1520 = vpack.c.b16 %v1508, %v1507
    %v1521 = vpack.c.b16 %v1510, %v1509
    %v1522 = vpack.c.b16 %v1512, %v1511
    %v1523 = vpack.c.b16 %v1514, %v1513
    %v1524 = vpack.c.b16 %v1516, %v1515
    %1533 = vmatprep.subr.bf16.mxu0 0
    %1534 = vmatpush1.bf16.msra.mxu0 %v1517
    %1535 = vmatprep.subr.bf16.mxu0 0
    %1536 = vmatpush1.bf16.msra.mxu0 %v1518
    %1537 = vmatprep.subr.bf16.mxu0 0
    %1538 = vmatpush1.bf16.msra.mxu0 %v1519
    %1539 = vmatprep.subr.bf16.mxu0 0
    %1540 = vmatpush1.bf16.msra.mxu0 %v1520
    %1541 = vmatprep.subr.bf16.mxu0 0
    %1542 = vmatpush1.bf16.msra.mxu0 %v1521
    %1543 = vmatprep.subr.bf16.mxu0 0
    %1544 = vmatpush1.bf16.msra.mxu0 %v1522
    %1545 = vmatprep.subr.bf16.mxu0 0
    %1546 = vmatpush1.bf16.msra.mxu0 %v1523
    %1547 = vmatprep.subr.bf16.mxu0 0
    %1548 = vmatpush1.bf16.msra.mxu0 %v1524
    %1549 = vmatprep.subr.bf16.mxu0 0
    %1550 = vmatpush1.bf16.msra.mxu0 0
    %1551 = vmatprep.subr.bf16.mxu0 0
    %1552 = vmatpush1.bf16.msra.mxu0 0
    %1553 = vmatprep.subr.bf16.mxu0 0
    %1554 = vmatpush1.bf16.msra.mxu0 0
    %1555 = vmatprep.subr.bf16.mxu0 0
    %1556 = vmatpush1.bf16.msra.mxu0 0
    %1557 = vmatprep.subr.bf16.mxu0 0
    %1558 = vmatpush1.bf16.msra.mxu0 0
    %1559 = vmatprep.subr.bf16.mxu0 0
    %1560 = vmatpush1.bf16.msra.mxu0 0
    %1561 = vmatprep.subr.bf16.mxu0 0
    %1562 = vmatpush1.bf16.msra.mxu0 0
    %1563 = vmatprep.subr.bf16.mxu0 0
    %1564 = vmatpush1.bf16.msra.mxu0 0
    %1565 = vmatprep.mubr.bf16.mxu0 0
    %1566 = vmatmul.mubr.bf16.gmra.mrb[0].mxu0 %v1458
    %v1567 = vpop.f32.mrb[0].mxu0
    %v1568 = vadd.f32 %v1483, %v1567
    %v1569 = vpop.f32.mrb[0].mxu0
    %v1570 = vpop.f32.mrb[0].mxu0
    %v1571 = vadd.f32 %v1483, %v1570
    %v1572 = vpop.f32.mrb[0].mxu0
    %1573 = vmatprep.mubr.bf16.mxu0 0
    %1574 = vmatmul.mubr.bf16.gmra.mrb[0].mxu0 %v1459
    %v1575 = vpop.f32.mrb[0].mxu0
    %v1576 = vadd.f32 %v1483, %v1575
    %v1577 = vpop.f32.mrb[0].mxu0
    %v1578 = vpop.f32.mrb[0].mxu0
    %v1579 = vadd.f32 %v1483, %v1578
    %v1580 = vpop.f32.mrb[0].mxu0
    %1581 = vmatprep.mubr.bf16.mxu0 0
    %1582 = vmatmul.mubr.bf16.gmra.mrb[0].mxu0 %v1460
    %v1583 = vpop.f32.mrb[0].mxu0
    %v1584 = vadd.f32 %v1483, %v1583
    %v1585 = vpop.f32.mrb[0].mxu0
    %v1586 = vpop.f32.mrb[0].mxu0
    %v1587 = vadd.f32 %v1483, %v1586
    %v1588 = vpop.f32.mrb[0].mxu0
    %1589 = vmatprep.mubr.bf16.mxu0 0
    %1590 = vmatmul.mubr.bf16.gmra.mrb[0].mxu0 %v1461
    %v1591 = vpop.f32.mrb[0].mxu0
    %v1592 = vadd.f32 %v1483, %v1591
    %v1593 = vpop.f32.mrb[0].mxu0
    %v1594 = vpop.f32.mrb[0].mxu0
    %v1595 = vadd.f32 %v1483, %v1594
    %v1596 = vpop.f32.mrb[0].mxu0
    %1597 = vdwg.mxu0
    %v1598 = vlaneseq
    %v1599 = vand.u32 %v1598, 127
    %vm1600 = vcmp.lt.s32.totalorder %v1599, 8
    %v1601 = vsel %vm1600, %v1568, -1e+30
    %v1602 = vsel %vm1600, %v1571, -1e+30
    %v1603 = vsel %vm1600, %v1576, -1e+30
    %v1604 = vsel %vm1600, %v1579, -1e+30
    %v1605 = vsel %vm1600, %v1584, -1e+30
    %v1606 = vsel %vm1600, %v1587, -1e+30
    %v1607 = vsel %vm1600, %v1592, -1e+30
    %v1608 = vsel %vm1600, %v1595, -1e+30
    %1609 = vmax.xlane.f32.xlu0 %v1601
    %v1610 = vpop.xlane.xlu0 %1609
    %1611 = vmax.xlane.f32.xlu0 %v1602
    %v1612 = vpop.xlane.xlu0 %1611
    %1613 = vmax.xlane.f32.xlu0 %v1603
    %v1614 = vpop.xlane.xlu0 %1613
    %1615 = vmax.xlane.f32.xlu0 %v1604
    %v1616 = vpop.xlane.xlu0 %1615
    %1617 = vmax.xlane.f32.xlu0 %v1605
    %v1618 = vpop.xlane.xlu0 %1617
    %1619 = vmax.xlane.f32.xlu0 %v1606
    %v1620 = vpop.xlane.xlu0 %1619
    %1621 = vmax.xlane.f32.xlu0 %v1607
    %v1622 = vpop.xlane.xlu0 %1621
    %1623 = vmax.xlane.f32.xlu0 %v1608
    %v1624 = vpop.xlane.xlu0 %1623
    %v1625 = vsub.f32 %v1601, %v1610
    %v1626 = vsub.f32 %v1602, %v1612
    %v1627 = vsub.f32 %v1603, %v1614
    %v1628 = vsub.f32 %v1604, %v1616
    %v1629 = vsub.f32 %v1605, %v1618
    %v1630 = vsub.f32 %v1606, %v1620
    %v1631 = vsub.f32 %v1607, %v1622
    %v1632 = vsub.f32 %v1608, %v1624
    %v1633 = vmul.f32 %v1625, 1.442695
    %v1634 = vpow.pop %v1633
    %v1635 = vmul.f32 %v1626, 1.442695
    %v1636 = vpow.pop %v1635
    %v1637 = vmul.f32 %v1627, 1.442695
    %v1638 = vpow.pop %v1637
    %v1639 = vmul.f32 %v1628, 1.442695
    %v1640 = vpow.pop %v1639
    %v1641 = vmul.f32 %v1629, 1.442695
    %v1642 = vpow.pop %v1641
    %v1643 = vmul.f32 %v1630, 1.442695
    %v1644 = vpow.pop %v1643
    %v1645 = vmul.f32 %v1631, 1.442695
    %v1646 = vpow.pop %v1645
    %v1647 = vmul.f32 %v1632, 1.442695
    %v1648 = vpow.pop %v1647
    %1649 = vadd.xlane.f32.xlu0 %v1634
    %v1650 = vpop.xlane.xlu0 %1649
    %1651 = vadd.xlane.f32.xlu0 %v1636
    %v1652 = vpop.xlane.xlu0 %1651
    %1653 = vadd.xlane.f32.xlu0 %v1638
    %v1654 = vpop.xlane.xlu0 %1653
    %1655 = vadd.xlane.f32.xlu0 %v1640
    %v1656 = vpop.xlane.xlu0 %1655
    %1657 = vadd.xlane.f32.xlu0 %v1642
    %v1658 = vpop.xlane.xlu0 %1657
    %1659 = vadd.xlane.f32.xlu0 %v1644
    %v1660 = vpop.xlane.xlu0 %1659
    %1661 = vadd.xlane.f32.xlu0 %v1646
    %v1662 = vpop.xlane.xlu0 %1661
    %1663 = vadd.xlane.f32.xlu0 %v1648
    %v1664 = vpop.xlane.xlu0 %1663
    %v1665 = vlog2.pop %v1650
    %v1666 = vmul.f32 %v1665, 0.6931472
    %v1667 = vlog2.pop %v1652
    %v1668 = vmul.f32 %v1667, 0.6931472
    %v1669 = vlog2.pop %v1654
    %v1670 = vmul.f32 %v1669, 0.6931472
    %v1671 = vlog2.pop %v1656
    %v1672 = vmul.f32 %v1671, 0.6931472
    %v1673 = vlog2.pop %v1658
    %v1674 = vmul.f32 %v1673, 0.6931472
    %v1675 = vlog2.pop %v1660
    %v1676 = vmul.f32 %v1675, 0.6931472
    %v1677 = vlog2.pop %v1662
    %v1678 = vmul.f32 %v1677, 0.6931472
    %v1679 = vlog2.pop %v1664
    %v1680 = vmul.f32 %v1679, 0.6931472
    %v1681 = vsub.f32 %v1625, %v1666
    %v1682 = vsub.f32 %v1626, %v1668
    %v1683 = vsub.f32 %v1627, %v1670
    %v1684 = vsub.f32 %v1628, %v1672
    %v1685 = vsub.f32 %v1629, %v1674
    %v1686 = vsub.f32 %v1630, %v1676
    %v1687 = vsub.f32 %v1631, %v1678
    %v1688 = vsub.f32 %v1632, %v1680
    %1689 = vst [vmem:[%s6] sm:$0xff] %v1681
    %1690 = vst [vmem:[%s6 + $0x8] sm:$0xff] %v1682
    %1691 = vst [vmem:[%s6 + $0x10] sm:$0xff] %v1683
    %1692 = vst [vmem:[%s6 + $0x18] sm:$0xff] %v1684
    %1693 = vst [vmem:[%s6 + $0x20] sm:$0xff] %v1685
    %1694 = vst [vmem:[%s6 + $0x28] sm:$0xff] %v1686
    %1695 = vst [vmem:[%s6 + $0x30] sm:$0xff] %v1687
    %1696 = vst [vmem:[%s6 + $0x38] sm:$0xff] %v1688
    // Predicated region
    $region38: #{decoder_forward.1} parent=1 // pred_check
      _
    $region39: #{decoder_forward.1} parent=1 // pred_check_branch
      %1698 = sbr.rel (0) target = $region41
    $region40: #{decoder_forward.1} parent=1 // pred_region
      _
    $region41: #{decoder_forward.1} parent=1 // pred_fallthru
      _
    // Predicated region
    $region42: #{decoder_forward.1} parent=1 // pred_check
      _
    $region43: #{decoder_forward.1} parent=1 // pred_check_branch
      %1700 = sbr.rel (0) target = $region45
    $region44: #{decoder_forward.1} parent=1 // pred_region
      _
    $region45: #{decoder_forward.1} parent=1 // pred_fallthru
      _
    %1701 = vsyncpa [#allocation4], 1
    %1702 = vsyncpa [#allocation6], 1

</llo_original>
